<compile_context>
chip_gen: v7x
topology: tpu7x:2x2x1
jax: 0.10.0
libtpu: 0.0.40
codegen_flags: <defaults>
</compile_context>

<pallas_src>
import functools

import jax
import jax.numpy as jnp
from jax.experimental import pallas as pl
from jax.experimental.pallas import tpu as pltpu


def _round_up(x, m):
    return ((x + m - 1) // m) * m


def lstm_encoder_kernel(ids_ref, emb_ref, wih_ref, whh_ref, b_ref, wout_ref,
                        out_ref, xp_scr, *, seq_len, batch, hidden, time_chunk):
    """Fused embedding + LSTM recurrence + posterior projection (gridless).

    ids_ref  : [T*BP, 1] int32    time-major token ids (batch-padded)
    emb_ref  : [VP, E]            embedding table, vocab zero-padded to VP
    wih_ref  : [E, GP]            input->gates weights, GP = round_up(4H, 128)
    whh_ref  : [H, GP]            hidden->gates weights (gate dim contiguous)
    b_ref    : [1, GP] f32        combined bias b_ih + b_hh
    wout_ref : [H, DZP]           posterior projection (lane-padded)
    out_ref  : [BP, DZP] f32      single lane-dense output slab (mean | logvar)
    xp_scr   : [Tc, BP, GP] f32   per-chunk hoisted input projection
    """
    H = hidden
    GP = wih_ref.shape[1]
    VP = emb_ref.shape[0]

    # Bias broadcast hoisted out of the recurrence (JAX does not CSE
    # broadcast_in_dim inside loops).
    bias = jnp.broadcast_to(b_ref[...], (batch, GP)).astype(jnp.float32)

    h = jnp.zeros((batch, H), jnp.float32)
    c = jnp.zeros((batch, H), jnp.float32)

    # Time is processed in chunks so the hoisted projection scratch stays
    # bounded regardless of sequence length.
    for start in range(0, seq_len, time_chunk):
        tc = min(time_chunk, seq_len - start)
        rows = tc * batch
        r0 = start * batch

        # (1) Fused embedding gather (one-hot matmul; table is VMEM-resident)
        #     + hoisted input projection for the whole chunk: two wide MXU
        #     matmuls, fully off the serial path.
        # TODO(synk): for very large vocabularies the one-hot gather should
        # fall back to a DMA gather / host-side take (table won't fit VMEM).
        ids = ids_ref[r0:r0 + rows, :]                            # [rows, 1]
        onehot = (jax.lax.broadcasted_iota(jnp.int32, (rows, VP), 1)
                  == ids).astype(emb_ref.dtype)                   # [rows, VP]
        x = jnp.dot(onehot, emb_ref[...],
                    preferred_element_type=jnp.float32)           # [rows, E]
        proj = jnp.dot(x.astype(wih_ref.dtype), wih_ref[...],
                       preferred_element_type=jnp.float32)        # [rows, GP]
        xp_scr[0:tc, :, :] = proj.reshape(tc, batch, GP)

        # (2) Serial recurrence: only h @ W_hh + gate math per step.
        # TODO(synk): keep W_hh resident in the MXU weight registers across
        # the recurrence via pltpu.matmul_push_rhs / matmul_acc_lhs /
        # matmul_pop; left as a follow-up (per-step width already cut 4x by
        # dropping the per-gate lane padding).
        def step(tt, carry):
            h_t, c_t = carry
            gates = (xp_scr[tt] + bias
                     + jnp.dot(h_t.astype(whh_ref.dtype), whh_ref[...],
                               preferred_element_type=jnp.float32))
            # PyTorch gate order i, f, g, o; contiguous H-wide lane slices
            # (lane select runs on the XLU slot, off the MXU critical path).
            i_g = jax.nn.sigmoid(gates[:, 0 * H:1 * H])
            f_g = jax.nn.sigmoid(gates[:, 1 * H:2 * H])
            g_g = jnp.tanh(gates[:, 2 * H:3 * H])
            o_g = jax.nn.sigmoid(gates[:, 3 * H:4 * H])
            c_new = f_g * c_t + i_g * g_g
            h_new = o_g * jnp.tanh(c_new)
            return (h_new, c_new)

        # Partial unroll keeps program size / vreg live ranges bounded for
        # realistic sequence lengths; full unroll only for short chunks.
        unroll = tc if tc <= 16 else 8
        h, c = jax.lax.fori_loop(0, tc, step, (h, c), unroll=unroll)

    # (3) Posterior projection -> one lane-dense (unmasked) output store.
    out_ref[...] = jnp.dot(h.astype(wout_ref.dtype), wout_ref[...],
                           preferred_element_type=jnp.float32
                           ).astype(out_ref.dtype)


def pack_lstm_encoder_params(emb_w, w_ih, w_hh, b_ih, b_hh, w_out,
                             *, matmul_dtype=jnp.float32):
    """Pad / transpose / cast the weights ONCE (hoisted off the per-call path).

    matmul_dtype=jnp.bfloat16 halves weight VMEM and MXU operand bandwidth on
    v5e, v6e and v7x alike (all three MXUs take bf16 natively); accumulation,
    bias add and gate/elementwise math stay f32 inside the kernel.
    """
    vocab, _E = emb_w.shape
    H = w_hh.shape[1]
    dz2 = w_out.shape[0]

    GP = _round_up(4 * H, 128)    # total gate width (no per-gate padding)
    DZP = _round_up(dz2, 128)     # lane-dense output slab
    VP = _round_up(vocab, 128)    # one-hot contraction depth

    emb_p = jnp.pad(emb_w, ((0, VP - vocab), (0, 0))).astype(matmul_dtype)
    # PyTorch weight_ih_l0 is [4H, E]; gates = x @ W_ih^T, so store [E, 4H].
    wih_p = jnp.pad(w_ih.T, ((0, 0), (0, GP - 4 * H))).astype(matmul_dtype)
    whh_p = jnp.pad(w_hh.T, ((0, 0), (0, GP - 4 * H))).astype(matmul_dtype)
    bias_p = jnp.pad((b_ih + b_hh)[None, :],
                     ((0, 0), (0, GP - 4 * H))).astype(jnp.float32)
    wout_p = jnp.pad(w_out.T, ((0, 0), (0, DZP - dz2))).astype(matmul_dtype)

    return dict(emb=emb_p, wih=wih_p, whh=whh_p, bias=bias_p, wout=wout_p,
                hidden=H, dim_z=dz2 // 2, vocab=vocab)


def lstm_encoder_posterior_packed(token_ids, packed, *, time_chunk=64):
    """token_ids: [B, T] int32 -> (mean [B, dim_z], logvar [B, dim_z])."""
    B, T = token_ids.shape
    H = packed["hidden"]
    dz = packed["dim_z"]
    GP = packed["wih"].shape[1]
    DZP = packed["wout"].shape[1]

    # Sublane-height batch pad.  NOTE: per-step MXU rows are only BP, so for
    # throughput callers should batch enough sequences that BP approaches the
    # MXU row height (128 on v5e, 256 on v6e/v7x) -- the serial-loop latency
    # then amortizes over 16-32x more rows essentially for free.
    BP = _round_up(B, 8)
    # TODO(synk): on v7x, split BP across the two TensorCores (batch grid axis
    # or pl.core_map) for batched calls; pointless at the toy batch used here.

    ids_tm = jnp.pad(token_ids.T.astype(jnp.int32), ((0, 0), (0, BP - B)))
    ids2d = ids_tm.reshape(T * BP, 1)

    tc = min(time_chunk, T)

    # Scoped-VMEM sizing: everything resident + headroom (v5e default scoped
    # limit is only 16 MiB); capped well below every target's physical VMEM.
    resident = (ids2d.nbytes + packed["emb"].nbytes + packed["wih"].nbytes
                + packed["whh"].nbytes + packed["bias"].nbytes
                + packed["wout"].nbytes + tc * BP * GP * 4 + BP * DZP * 4)
    vmem_limit = int(min(max(2 * resident + (4 << 20), 32 << 20), 96 << 20))

    kernel = functools.partial(lstm_encoder_kernel, seq_len=T, batch=BP,
                               hidden=H, time_chunk=tc)
    vmem = pl.BlockSpec(memory_space=pltpu.MemorySpace.VMEM)

    out = pl.pallas_call(
        kernel,
        out_shape=jax.ShapeDtypeStruct((BP, DZP), jnp.float32),
        in_specs=[vmem] * 6,
        out_specs=vmem,
        scratch_shapes=[pltpu.VMEM((tc, BP, GP), jnp.float32)],
        compiler_params=pltpu.CompilerParams(vmem_limit_bytes=vmem_limit),
    )(ids2d, packed["emb"], packed["wih"], packed["whh"], packed["bias"],
      packed["wout"])

    out = out[:B, :2 * dz]
    return out[:, :dz], out[:, dz:]


def lstm_encoder_posterior(token_ids, emb_w, w_ih, w_hh, b_ih, b_hh, w_out,
                           *, matmul_dtype=jnp.float32, time_chunk=64):
    """Convenience wrapper: packs weights then calls the packed path."""
    packed = pack_lstm_encoder_params(emb_w, w_ih, w_hh, b_ih, b_hh, w_out,
                                      matmul_dtype=matmul_dtype)
    return lstm_encoder_posterior_packed(token_ids, packed,
                                         time_chunk=time_chunk)


def _ref_posterior(token_ids, emb_w, w_ih, w_hh, b_ih, b_hh, w_out):
    """Pure-JAX reference matching PyTorch nn.LSTM + Linear semantics."""
    emb = jnp.take(emb_w, token_ids, axis=0)  # [B, T, E]
    B, _T, _ = emb.shape
    H = w_hh.shape[1]

    def step(carry, x_t):
        h, c = carry
        gates = x_t @ w_ih.T + b_ih + h @ w_hh.T + b_hh
        i = jax.nn.sigmoid(gates[:, 0 * H:1 * H])
        f = jax.nn.sigmoid(gates[:, 1 * H:2 * H])
        g = jnp.tanh(gates[:, 2 * H:3 * H])
        o = jax.nn.sigmoid(gates[:, 3 * H:4 * H])
        c = f * c + i * g
        h = o * jnp.tanh(c)
        return (h, c), None

    h0 = jnp.zeros((B, H), jnp.float32)
    c0 = jnp.zeros((B, H), jnp.float32)
    (h_last, _), _ = jax.lax.scan(step, (h0, c0), jnp.transpose(emb, (1, 0, 2)))
    out = h_last @ w_out.T
    dz = w_out.shape[0] // 2
    return out[:, :dz], out[:, dz:]


if __name__ == "__main__":
    # args: vocab_size=50, embedding_size=32, hidden_size=32, dim_z=16
    VOCAB, E, H, DZ = 50, 32, 32, 16
    B, T = 2, 8

    key = jax.random.PRNGKey(0)
    ks = jax.random.split(key, 8)
    # Deterministic synthetic parameter init (mimics model_init/emb_init).
    emb_w = jax.random.uniform(ks[0], (VOCAB, E), jnp.float32, -0.1, 0.1)
    w_ih = jax.random.uniform(ks[1], (4 * H, E), jnp.float32, -0.1, 0.1)
    w_hh = jax.random.uniform(ks[2], (4 * H, H), jnp.float32, -0.1, 0.1)
    b_ih = jax.random.uniform(ks[3], (4 * H,), jnp.float32, -0.1, 0.1)
    b_hh = jax.random.uniform(ks[4], (4 * H,), jnp.float32, -0.1, 0.1)
    w_out = jax.random.uniform(ks[5], (2 * DZ, H), jnp.float32, -0.1, 0.1)

    token_ids = jax.random.randint(ks[6], (B, T), 0, VOCAB, dtype=jnp.int32)

    mean_ref, logvar_ref = _ref_posterior(
        token_ids, emb_w, w_ih, w_hh, b_ih, b_hh, w_out)

    # f32 matmul operands: tight match against the reference.  Weights are
    # packed once and reused (hoisted off the per-forward path).
    packed_f32 = pack_lstm_encoder_params(emb_w, w_ih, w_hh, b_ih, b_hh, w_out)
    mean, logvar = lstm_encoder_posterior_packed(token_ids, packed_f32)
    jax.block_until_ready((mean, logvar))
    assert mean.shape == (B, DZ) and logvar.shape == (B, DZ)
    assert jnp.allclose(mean, mean_ref, atol=1e-5, rtol=1e-5)
    assert jnp.allclose(logvar, logvar_ref, atol=1e-5, rtol=1e-5)

    # bf16 matmul operands (fast MXU path on v5e/v6e/v7x); f32 accumulation,
    # bias and gate math.
    packed_bf16 = pack_lstm_encoder_params(emb_w, w_ih, w_hh, b_ih, b_hh,
                                           w_out, matmul_dtype=jnp.bfloat16)
    mean_bf, logvar_bf = lstm_encoder_posterior_packed(token_ids, packed_bf16)
    jax.block_until_ready((mean_bf, logvar_bf))
    assert jnp.allclose(mean_bf, mean_ref, atol=2e-2, rtol=2e-2)
    assert jnp.allclose(logvar_bf, logvar_ref, atol=2e-2, rtol=2e-2)

    # TODO(synk): posterior_to_zs / posterior_to_kl / prior_to_zs / forward
    # raise NotImplementedError in the PyTorch module, so only the implemented
    # input_to_posterior path is kernelized.
    print("KERNEL_OK")
</pallas_src>

<mosaic_0001>
module attributes {stable_mosaic.version = 11 : i64} {
  func.func @lstm_encoder_kernel(%arg0: memref<64x1xi32, #tpu.memory_space<vmem>>, %arg1: memref<128x32xf32, #tpu.memory_space<vmem>>, %arg2: memref<32x128xf32, #tpu.memory_space<vmem>>, %arg3: memref<32x128xf32, #tpu.memory_space<vmem>>, %arg4: memref<1x128xf32, #tpu.memory_space<vmem>>, %arg5: memref<32x128xf32, #tpu.memory_space<vmem>>, %arg6: memref<8x128xf32, #tpu.memory_space<vmem>>, %arg7: memref<8x8x128xf32, #tpu.memory_space<vmem>>) attributes {dimension_semantics = [], scalar_prefetch = 0 : i64, scratch_operands = 1 : i64, tpu.core_type = #tpu.core_type<tc>} {
    %c0 = arith.constant 0 : index
    %c0_0 = arith.constant 0 : index
    %0 = vector.load %arg4[%c0, %c0_0] : memref<1x128xf32, #tpu.memory_space<vmem>>, vector<1x128xf32>
    %1 = vector.shape_cast %0 : vector<1x128xf32> to vector<1x128xf32>
    %2 = vector.broadcast %1 : vector<1x128xf32> to vector<8x128xf32>
    %cst = arith.constant 0.000000e+00 : f32
    %3 = vector.broadcast %cst : f32 to vector<8x32xf32>
    %cst_1 = arith.constant 0.000000e+00 : f32
    %4 = vector.broadcast %cst_1 : f32 to vector<8x32xf32>
    %c0_2 = arith.constant 0 : index
    %c0_3 = arith.constant 0 : index
    %5 = vector.load %arg0[%c0_2, %c0_3] : memref<64x1xi32, #tpu.memory_space<vmem>>, vector<64x1xi32>
    %6 = tpu.iota {dimensions = array<i32: 1>} : vector<64x128xi32>
    %7 = vector.broadcast %5 : vector<64x1xi32> to vector<64x128xi32>
    %8 = arith.cmpi eq, %6, %7 : vector<64x128xi32>
    %9 = arith.extui %8 : vector<64x128xi1> to vector<64x128xi32>
    %10 = arith.sitofp %9 : vector<64x128xi32> to vector<64x128xf32>
    %c0_4 = arith.constant 0 : index
    %c0_5 = arith.constant 0 : index
    %11 = vector.load %arg1[%c0_4, %c0_5] : memref<128x32xf32, #tpu.memory_space<vmem>>, vector<128x32xf32>
    %cst_6 = arith.constant dense<0.000000e+00> : vector<64x32xf32>
    %12 = tpu.matmul %10, %11, %cst_6 {dimension_numbers = #tpu.dot_dimension_numbers<[1], [0], [0], [1], [0, 0, 1, 1], [], []>} : vector<64x128xf32>, vector<128x32xf32>, vector<64x32xf32> -> vector<64x32xf32>
    %c0_7 = arith.constant 0 : index
    %c0_8 = arith.constant 0 : index
    %13 = vector.load %arg2[%c0_7, %c0_8] : memref<32x128xf32, #tpu.memory_space<vmem>>, vector<32x128xf32>
    %cst_9 = arith.constant dense<0.000000e+00> : vector<64x128xf32>
    %14 = tpu.matmul %12, %13, %cst_9 {dimension_numbers = #tpu.dot_dimension_numbers<[1], [0], [0], [1], [0, 0, 1, 1], [], []>} : vector<64x32xf32>, vector<32x128xf32>, vector<64x128xf32> -> vector<64x128xf32>
    %15 = vector.shape_cast %14 : vector<64x128xf32> to vector<8x8x128xf32>
    %c0_10 = arith.constant 0 : index
    %c0_11 = arith.constant 0 : index
    %c0_12 = arith.constant 0 : index
    %16 = vector.load %arg7[%c0_10, %c0_11, %c0_12] : memref<8x8x128xf32, #tpu.memory_space<vmem>>, vector<8x8x128xf32>
    tpu.vector_store %arg7[%c0_10, %c0_11, %c0_12], %15 {strides = array<i32>} : memref<8x8x128xf32, #tpu.memory_space<vmem>>, vector<8x8x128xf32>,
    %c0_i32 = arith.constant 0 : i32
    %17 = arith.index_cast %c0_i32 : i32 to index
    %c0_13 = arith.constant 0 : index
    %c0_14 = arith.constant 0 : index
    %18 = vector.load %arg7[%17, %c0_13, %c0_14] : memref<8x8x128xf32, #tpu.memory_space<vmem>>, vector<1x8x128xf32>
    %19 = vector.shape_cast %18 : vector<1x8x128xf32> to vector<8x128xf32>
    %20 = arith.addf %19, %2 : vector<8x128xf32>
    %c0_15 = arith.constant 0 : index
    %c0_16 = arith.constant 0 : index
    %21 = vector.load %arg3[%c0_15, %c0_16] : memref<32x128xf32, #tpu.memory_space<vmem>>, vector<32x128xf32>
    %cst_17 = arith.constant dense<0.000000e+00> : vector<8x128xf32>
    %22 = tpu.matmul %3, %21, %cst_17 {dimension_numbers = #tpu.dot_dimension_numbers<[1], [0], [0], [1], [0, 0, 1, 1], [], []>} : vector<8x32xf32>, vector<32x128xf32>, vector<8x128xf32> -> vector<8x128xf32>
    %23 = arith.addf %20, %22 : vector<8x128xf32>
    %24 = vector.extract_strided_slice %23 {offsets = [0, 0], sizes = [8, 32], strides = [1, 1]} : vector<8x128xf32> to vector<8x32xf32>
    %25 = arith.negf %24 : vector<8x32xf32>
    %26 = math.exp %25 : vector<8x32xf32>
    %cst_18 = arith.constant 1.000000e+00 : f32
    %27 = vector.broadcast %cst_18 : f32 to vector<8x32xf32>
    %28 = arith.addf %27, %26 : vector<8x32xf32>
    %29 = arith.divf %27, %28 : vector<8x32xf32>
    %30 = vector.extract_strided_slice %23 {offsets = [0, 32], sizes = [8, 32], strides = [1, 1]} : vector<8x128xf32> to vector<8x32xf32>
    %31 = arith.negf %30 : vector<8x32xf32>
    %32 = math.exp %31 : vector<8x32xf32>
    %cst_19 = arith.constant 1.000000e+00 : f32
    %33 = vector.broadcast %cst_19 : f32 to vector<8x32xf32>
    %34 = arith.addf %33, %32 : vector<8x32xf32>
    %35 = arith.divf %33, %34 : vector<8x32xf32>
    %36 = vector.extract_strided_slice %23 {offsets = [0, 64], sizes = [8, 32], strides = [1, 1]} : vector<8x128xf32> to vector<8x32xf32>
    %37 = math.tanh %36 : vector<8x32xf32>
    %38 = vector.extract_strided_slice %23 {offsets = [0, 96], sizes = [8, 32], strides = [1, 1]} : vector<8x128xf32> to vector<8x32xf32>
    %39 = arith.negf %38 : vector<8x32xf32>
    %40 = math.exp %39 : vector<8x32xf32>
    %cst_20 = arith.constant 1.000000e+00 : f32
    %41 = vector.broadcast %cst_20 : f32 to vector<8x32xf32>
    %42 = arith.addf %41, %40 : vector<8x32xf32>
    %43 = arith.divf %41, %42 : vector<8x32xf32>
    %44 = arith.mulf %35, %4 : vector<8x32xf32>
    %45 = arith.mulf %29, %37 : vector<8x32xf32>
    %46 = arith.addf %44, %45 : vector<8x32xf32>
    %47 = math.tanh %46 : vector<8x32xf32>
    %48 = arith.mulf %43, %47 : vector<8x32xf32>
    %c1_i32 = arith.constant 1 : i32
    %49 = arith.index_cast %c1_i32 : i32 to index
    %c0_21 = arith.constant 0 : index
    %c0_22 = arith.constant 0 : index
    %50 = vector.load %arg7[%49, %c0_21, %c0_22] : memref<8x8x128xf32, #tpu.memory_space<vmem>>, vector<1x8x128xf32>
    %51 = vector.shape_cast %50 : vector<1x8x128xf32> to vector<8x128xf32>
    %52 = arith.addf %51, %2 : vector<8x128xf32>
    %c0_23 = arith.constant 0 : index
    %c0_24 = arith.constant 0 : index
    %53 = vector.load %arg3[%c0_23, %c0_24] : memref<32x128xf32, #tpu.memory_space<vmem>>, vector<32x128xf32>
    %cst_25 = arith.constant dense<0.000000e+00> : vector<8x128xf32>
    %54 = tpu.matmul %48, %53, %cst_25 {dimension_numbers = #tpu.dot_dimension_numbers<[1], [0], [0], [1], [0, 0, 1, 1], [], []>} : vector<8x32xf32>, vector<32x128xf32>, vector<8x128xf32> -> vector<8x128xf32>
    %55 = arith.addf %52, %54 : vector<8x128xf32>
    %56 = vector.extract_strided_slice %55 {offsets = [0, 0], sizes = [8, 32], strides = [1, 1]} : vector<8x128xf32> to vector<8x32xf32>
    %57 = arith.negf %56 : vector<8x32xf32>
    %58 = math.exp %57 : vector<8x32xf32>
    %cst_26 = arith.constant 1.000000e+00 : f32
    %59 = vector.broadcast %cst_26 : f32 to vector<8x32xf32>
    %60 = arith.addf %59, %58 : vector<8x32xf32>
    %61 = arith.divf %59, %60 : vector<8x32xf32>
    %62 = vector.extract_strided_slice %55 {offsets = [0, 32], sizes = [8, 32], strides = [1, 1]} : vector<8x128xf32> to vector<8x32xf32>
    %63 = arith.negf %62 : vector<8x32xf32>
    %64 = math.exp %63 : vector<8x32xf32>
    %cst_27 = arith.constant 1.000000e+00 : f32
    %65 = vector.broadcast %cst_27 : f32 to vector<8x32xf32>
    %66 = arith.addf %65, %64 : vector<8x32xf32>
    %67 = arith.divf %65, %66 : vector<8x32xf32>
    %68 = vector.extract_strided_slice %55 {offsets = [0, 64], sizes = [8, 32], strides = [1, 1]} : vector<8x128xf32> to vector<8x32xf32>
    %69 = math.tanh %68 : vector<8x32xf32>
    %70 = vector.extract_strided_slice %55 {offsets = [0, 96], sizes = [8, 32], strides = [1, 1]} : vector<8x128xf32> to vector<8x32xf32>
    %71 = arith.negf %70 : vector<8x32xf32>
    %72 = math.exp %71 : vector<8x32xf32>
    %cst_28 = arith.constant 1.000000e+00 : f32
    %73 = vector.broadcast %cst_28 : f32 to vector<8x32xf32>
    %74 = arith.addf %73, %72 : vector<8x32xf32>
    %75 = arith.divf %73, %74 : vector<8x32xf32>
    %76 = arith.mulf %67, %46 : vector<8x32xf32>
    %77 = arith.mulf %61, %69 : vector<8x32xf32>
    %78 = arith.addf %76, %77 : vector<8x32xf32>
    %79 = math.tanh %78 : vector<8x32xf32>
    %80 = arith.mulf %75, %79 : vector<8x32xf32>
    %c2_i32 = arith.constant 2 : i32
    %81 = arith.index_cast %c2_i32 : i32 to index
    %c0_29 = arith.constant 0 : index
    %c0_30 = arith.constant 0 : index
    %82 = vector.load %arg7[%81, %c0_29, %c0_30] : memref<8x8x128xf32, #tpu.memory_space<vmem>>, vector<1x8x128xf32>
    %83 = vector.shape_cast %82 : vector<1x8x128xf32> to vector<8x128xf32>
    %84 = arith.addf %83, %2 : vector<8x128xf32>
    %c0_31 = arith.constant 0 : index
    %c0_32 = arith.constant 0 : index
    %85 = vector.load %arg3[%c0_31, %c0_32] : memref<32x128xf32, #tpu.memory_space<vmem>>, vector<32x128xf32>
    %cst_33 = arith.constant dense<0.000000e+00> : vector<8x128xf32>
    %86 = tpu.matmul %80, %85, %cst_33 {dimension_numbers = #tpu.dot_dimension_numbers<[1], [0], [0], [1], [0, 0, 1, 1], [], []>} : vector<8x32xf32>, vector<32x128xf32>, vector<8x128xf32> -> vector<8x128xf32>
    %87 = arith.addf %84, %86 : vector<8x128xf32>
    %88 = vector.extract_strided_slice %87 {offsets = [0, 0], sizes = [8, 32], strides = [1, 1]} : vector<8x128xf32> to vector<8x32xf32>
    %89 = arith.negf %88 : vector<8x32xf32>
    %90 = math.exp %89 : vector<8x32xf32>
    %cst_34 = arith.constant 1.000000e+00 : f32
    %91 = vector.broadcast %cst_34 : f32 to vector<8x32xf32>
    %92 = arith.addf %91, %90 : vector<8x32xf32>
    %93 = arith.divf %91, %92 : vector<8x32xf32>
    %94 = vector.extract_strided_slice %87 {offsets = [0, 32], sizes = [8, 32], strides = [1, 1]} : vector<8x128xf32> to vector<8x32xf32>
    %95 = arith.negf %94 : vector<8x32xf32>
    %96 = math.exp %95 : vector<8x32xf32>
    %cst_35 = arith.constant 1.000000e+00 : f32
    %97 = vector.broadcast %cst_35 : f32 to vector<8x32xf32>
    %98 = arith.addf %97, %96 : vector<8x32xf32>
    %99 = arith.divf %97, %98 : vector<8x32xf32>
    %100 = vector.extract_strided_slice %87 {offsets = [0, 64], sizes = [8, 32], strides = [1, 1]} : vector<8x128xf32> to vector<8x32xf32>
    %101 = math.tanh %100 : vector<8x32xf32>
    %102 = vector.extract_strided_slice %87 {offsets = [0, 96], sizes = [8, 32], strides = [1, 1]} : vector<8x128xf32> to vector<8x32xf32>
    %103 = arith.negf %102 : vector<8x32xf32>
    %104 = math.exp %103 : vector<8x32xf32>
    %cst_36 = arith.constant 1.000000e+00 : f32
    %105 = vector.broadcast %cst_36 : f32 to vector<8x32xf32>
    %106 = arith.addf %105, %104 : vector<8x32xf32>
    %107 = arith.divf %105, %106 : vector<8x32xf32>
    %108 = arith.mulf %99, %78 : vector<8x32xf32>
    %109 = arith.mulf %93, %101 : vector<8x32xf32>
    %110 = arith.addf %108, %109 : vector<8x32xf32>
    %111 = math.tanh %110 : vector<8x32xf32>
    %112 = arith.mulf %107, %111 : vector<8x32xf32>
    %c3_i32 = arith.constant 3 : i32
    %113 = arith.index_cast %c3_i32 : i32 to index
    %c0_37 = arith.constant 0 : index
    %c0_38 = arith.constant 0 : index
    %114 = vector.load %arg7[%113, %c0_37, %c0_38] : memref<8x8x128xf32, #tpu.memory_space<vmem>>, vector<1x8x128xf32>
    %115 = vector.shape_cast %114 : vector<1x8x128xf32> to vector<8x128xf32>
    %116 = arith.addf %115, %2 : vector<8x128xf32>
    %c0_39 = arith.constant 0 : index
    %c0_40 = arith.constant 0 : index
    %117 = vector.load %arg3[%c0_39, %c0_40] : memref<32x128xf32, #tpu.memory_space<vmem>>, vector<32x128xf32>
    %cst_41 = arith.constant dense<0.000000e+00> : vector<8x128xf32>
    %118 = tpu.matmul %112, %117, %cst_41 {dimension_numbers = #tpu.dot_dimension_numbers<[1], [0], [0], [1], [0, 0, 1, 1], [], []>} : vector<8x32xf32>, vector<32x128xf32>, vector<8x128xf32> -> vector<8x128xf32>
    %119 = arith.addf %116, %118 : vector<8x128xf32>
    %120 = vector.extract_strided_slice %119 {offsets = [0, 0], sizes = [8, 32], strides = [1, 1]} : vector<8x128xf32> to vector<8x32xf32>
    %121 = arith.negf %120 : vector<8x32xf32>
    %122 = math.exp %121 : vector<8x32xf32>
    %cst_42 = arith.constant 1.000000e+00 : f32
    %123 = vector.broadcast %cst_42 : f32 to vector<8x32xf32>
    %124 = arith.addf %123, %122 : vector<8x32xf32>
    %125 = arith.divf %123, %124 : vector<8x32xf32>
    %126 = vector.extract_strided_slice %119 {offsets = [0, 32], sizes = [8, 32], strides = [1, 1]} : vector<8x128xf32> to vector<8x32xf32>
    %127 = arith.negf %126 : vector<8x32xf32>
    %128 = math.exp %127 : vector<8x32xf32>
    %cst_43 = arith.constant 1.000000e+00 : f32
    %129 = vector.broadcast %cst_43 : f32 to vector<8x32xf32>
    %130 = arith.addf %129, %128 : vector<8x32xf32>
    %131 = arith.divf %129, %130 : vector<8x32xf32>
    %132 = vector.extract_strided_slice %119 {offsets = [0, 64], sizes = [8, 32], strides = [1, 1]} : vector<8x128xf32> to vector<8x32xf32>
    %133 = math.tanh %132 : vector<8x32xf32>
    %134 = vector.extract_strided_slice %119 {offsets = [0, 96], sizes = [8, 32], strides = [1, 1]} : vector<8x128xf32> to vector<8x32xf32>
    %135 = arith.negf %134 : vector<8x32xf32>
    %136 = math.exp %135 : vector<8x32xf32>
    %cst_44 = arith.constant 1.000000e+00 : f32
    %137 = vector.broadcast %cst_44 : f32 to vector<8x32xf32>
    %138 = arith.addf %137, %136 : vector<8x32xf32>
    %139 = arith.divf %137, %138 : vector<8x32xf32>
    %140 = arith.mulf %131, %110 : vector<8x32xf32>
    %141 = arith.mulf %125, %133 : vector<8x32xf32>
    %142 = arith.addf %140, %141 : vector<8x32xf32>
    %143 = math.tanh %142 : vector<8x32xf32>
    %144 = arith.mulf %139, %143 : vector<8x32xf32>
    %c4_i32 = arith.constant 4 : i32
    %145 = arith.index_cast %c4_i32 : i32 to index
    %c0_45 = arith.constant 0 : index
    %c0_46 = arith.constant 0 : index
    %146 = vector.load %arg7[%145, %c0_45, %c0_46] : memref<8x8x128xf32, #tpu.memory_space<vmem>>, vector<1x8x128xf32>
    %147 = vector.shape_cast %146 : vector<1x8x128xf32> to vector<8x128xf32>
    %148 = arith.addf %147, %2 : vector<8x128xf32>
    %c0_47 = arith.constant 0 : index
    %c0_48 = arith.constant 0 : index
    %149 = vector.load %arg3[%c0_47, %c0_48] : memref<32x128xf32, #tpu.memory_space<vmem>>, vector<32x128xf32>
    %cst_49 = arith.constant dense<0.000000e+00> : vector<8x128xf32>
    %150 = tpu.matmul %144, %149, %cst_49 {dimension_numbers = #tpu.dot_dimension_numbers<[1], [0], [0], [1], [0, 0, 1, 1], [], []>} : vector<8x32xf32>, vector<32x128xf32>, vector<8x128xf32> -> vector<8x128xf32>
    %151 = arith.addf %148, %150 : vector<8x128xf32>
    %152 = vector.extract_strided_slice %151 {offsets = [0, 0], sizes = [8, 32], strides = [1, 1]} : vector<8x128xf32> to vector<8x32xf32>
    %153 = arith.negf %152 : vector<8x32xf32>
    %154 = math.exp %153 : vector<8x32xf32>
    %cst_50 = arith.constant 1.000000e+00 : f32
    %155 = vector.broadcast %cst_50 : f32 to vector<8x32xf32>
    %156 = arith.addf %155, %154 : vector<8x32xf32>
    %157 = arith.divf %155, %156 : vector<8x32xf32>
    %158 = vector.extract_strided_slice %151 {offsets = [0, 32], sizes = [8, 32], strides = [1, 1]} : vector<8x128xf32> to vector<8x32xf32>
    %159 = arith.negf %158 : vector<8x32xf32>
    %160 = math.exp %159 : vector<8x32xf32>
    %cst_51 = arith.constant 1.000000e+00 : f32
    %161 = vector.broadcast %cst_51 : f32 to vector<8x32xf32>
    %162 = arith.addf %161, %160 : vector<8x32xf32>
    %163 = arith.divf %161, %162 : vector<8x32xf32>
    %164 = vector.extract_strided_slice %151 {offsets = [0, 64], sizes = [8, 32], strides = [1, 1]} : vector<8x128xf32> to vector<8x32xf32>
    %165 = math.tanh %164 : vector<8x32xf32>
    %166 = vector.extract_strided_slice %151 {offsets = [0, 96], sizes = [8, 32], strides = [1, 1]} : vector<8x128xf32> to vector<8x32xf32>
    %167 = arith.negf %166 : vector<8x32xf32>
    %168 = math.exp %167 : vector<8x32xf32>
    %cst_52 = arith.constant 1.000000e+00 : f32
    %169 = vector.broadcast %cst_52 : f32 to vector<8x32xf32>
    %170 = arith.addf %169, %168 : vector<8x32xf32>
    %171 = arith.divf %169, %170 : vector<8x32xf32>
    %172 = arith.mulf %163, %142 : vector<8x32xf32>
    %173 = arith.mulf %157, %165 : vector<8x32xf32>
    %174 = arith.addf %172, %173 : vector<8x32xf32>
    %175 = math.tanh %174 : vector<8x32xf32>
    %176 = arith.mulf %171, %175 : vector<8x32xf32>
    %c5_i32 = arith.constant 5 : i32
    %177 = arith.index_cast %c5_i32 : i32 to index
    %c0_53 = arith.constant 0 : index
    %c0_54 = arith.constant 0 : index
    %178 = vector.load %arg7[%177, %c0_53, %c0_54] : memref<8x8x128xf32, #tpu.memory_space<vmem>>, vector<1x8x128xf32>
    %179 = vector.shape_cast %178 : vector<1x8x128xf32> to vector<8x128xf32>
    %180 = arith.addf %179, %2 : vector<8x128xf32>
    %c0_55 = arith.constant 0 : index
    %c0_56 = arith.constant 0 : index
    %181 = vector.load %arg3[%c0_55, %c0_56] : memref<32x128xf32, #tpu.memory_space<vmem>>, vector<32x128xf32>
    %cst_57 = arith.constant dense<0.000000e+00> : vector<8x128xf32>
    %182 = tpu.matmul %176, %181, %cst_57 {dimension_numbers = #tpu.dot_dimension_numbers<[1], [0], [0], [1], [0, 0, 1, 1], [], []>} : vector<8x32xf32>, vector<32x128xf32>, vector<8x128xf32> -> vector<8x128xf32>
    %183 = arith.addf %180, %182 : vector<8x128xf32>
    %184 = vector.extract_strided_slice %183 {offsets = [0, 0], sizes = [8, 32], strides = [1, 1]} : vector<8x128xf32> to vector<8x32xf32>
    %185 = arith.negf %184 : vector<8x32xf32>
    %186 = math.exp %185 : vector<8x32xf32>
    %cst_58 = arith.constant 1.000000e+00 : f32
    %187 = vector.broadcast %cst_58 : f32 to vector<8x32xf32>
    %188 = arith.addf %187, %186 : vector<8x32xf32>
    %189 = arith.divf %187, %188 : vector<8x32xf32>
    %190 = vector.extract_strided_slice %183 {offsets = [0, 32], sizes = [8, 32], strides = [1, 1]} : vector<8x128xf32> to vector<8x32xf32>
    %191 = arith.negf %190 : vector<8x32xf32>
    %192 = math.exp %191 : vector<8x32xf32>
    %cst_59 = arith.constant 1.000000e+00 : f32
    %193 = vector.broadcast %cst_59 : f32 to vector<8x32xf32>
    %194 = arith.addf %193, %192 : vector<8x32xf32>
    %195 = arith.divf %193, %194 : vector<8x32xf32>
    %196 = vector.extract_strided_slice %183 {offsets = [0, 64], sizes = [8, 32], strides = [1, 1]} : vector<8x128xf32> to vector<8x32xf32>
    %197 = math.tanh %196 : vector<8x32xf32>
    %198 = vector.extract_strided_slice %183 {offsets = [0, 96], sizes = [8, 32], strides = [1, 1]} : vector<8x128xf32> to vector<8x32xf32>
    %199 = arith.negf %198 : vector<8x32xf32>
    %200 = math.exp %199 : vector<8x32xf32>
    %cst_60 = arith.constant 1.000000e+00 : f32
    %201 = vector.broadcast %cst_60 : f32 to vector<8x32xf32>
    %202 = arith.addf %201, %200 : vector<8x32xf32>
    %203 = arith.divf %201, %202 : vector<8x32xf32>
    %204 = arith.mulf %195, %174 : vector<8x32xf32>
    %205 = arith.mulf %189, %197 : vector<8x32xf32>
    %206 = arith.addf %204, %205 : vector<8x32xf32>
    %207 = math.tanh %206 : vector<8x32xf32>
    %208 = arith.mulf %203, %207 : vector<8x32xf32>
    %c6_i32 = arith.constant 6 : i32
    %209 = arith.index_cast %c6_i32 : i32 to index
    %c0_61 = arith.constant 0 : index
    %c0_62 = arith.constant 0 : index
    %210 = vector.load %arg7[%209, %c0_61, %c0_62] : memref<8x8x128xf32, #tpu.memory_space<vmem>>, vector<1x8x128xf32>
    %211 = vector.shape_cast %210 : vector<1x8x128xf32> to vector<8x128xf32>
    %212 = arith.addf %211, %2 : vector<8x128xf32>
    %c0_63 = arith.constant 0 : index
    %c0_64 = arith.constant 0 : index
    %213 = vector.load %arg3[%c0_63, %c0_64] : memref<32x128xf32, #tpu.memory_space<vmem>>, vector<32x128xf32>
    %cst_65 = arith.constant dense<0.000000e+00> : vector<8x128xf32>
    %214 = tpu.matmul %208, %213, %cst_65 {dimension_numbers = #tpu.dot_dimension_numbers<[1], [0], [0], [1], [0, 0, 1, 1], [], []>} : vector<8x32xf32>, vector<32x128xf32>, vector<8x128xf32> -> vector<8x128xf32>
    %215 = arith.addf %212, %214 : vector<8x128xf32>
    %216 = vector.extract_strided_slice %215 {offsets = [0, 0], sizes = [8, 32], strides = [1, 1]} : vector<8x128xf32> to vector<8x32xf32>
    %217 = arith.negf %216 : vector<8x32xf32>
    %218 = math.exp %217 : vector<8x32xf32>
    %cst_66 = arith.constant 1.000000e+00 : f32
    %219 = vector.broadcast %cst_66 : f32 to vector<8x32xf32>
    %220 = arith.addf %219, %218 : vector<8x32xf32>
    %221 = arith.divf %219, %220 : vector<8x32xf32>
    %222 = vector.extract_strided_slice %215 {offsets = [0, 32], sizes = [8, 32], strides = [1, 1]} : vector<8x128xf32> to vector<8x32xf32>
    %223 = arith.negf %222 : vector<8x32xf32>
    %224 = math.exp %223 : vector<8x32xf32>
    %cst_67 = arith.constant 1.000000e+00 : f32
    %225 = vector.broadcast %cst_67 : f32 to vector<8x32xf32>
    %226 = arith.addf %225, %224 : vector<8x32xf32>
    %227 = arith.divf %225, %226 : vector<8x32xf32>
    %228 = vector.extract_strided_slice %215 {offsets = [0, 64], sizes = [8, 32], strides = [1, 1]} : vector<8x128xf32> to vector<8x32xf32>
    %229 = math.tanh %228 : vector<8x32xf32>
    %230 = vector.extract_strided_slice %215 {offsets = [0, 96], sizes = [8, 32], strides = [1, 1]} : vector<8x128xf32> to vector<8x32xf32>
    %231 = arith.negf %230 : vector<8x32xf32>
    %232 = math.exp %231 : vector<8x32xf32>
    %cst_68 = arith.constant 1.000000e+00 : f32
    %233 = vector.broadcast %cst_68 : f32 to vector<8x32xf32>
    %234 = arith.addf %233, %232 : vector<8x32xf32>
    %235 = arith.divf %233, %234 : vector<8x32xf32>
    %236 = arith.mulf %227, %206 : vector<8x32xf32>
    %237 = arith.mulf %221, %229 : vector<8x32xf32>
    %238 = arith.addf %236, %237 : vector<8x32xf32>
    %239 = math.tanh %238 : vector<8x32xf32>
    %240 = arith.mulf %235, %239 : vector<8x32xf32>
    %c7_i32 = arith.constant 7 : i32
    %241 = arith.index_cast %c7_i32 : i32 to index
    %c0_69 = arith.constant 0 : index
    %c0_70 = arith.constant 0 : index
    %242 = vector.load %arg7[%241, %c0_69, %c0_70] : memref<8x8x128xf32, #tpu.memory_space<vmem>>, vector<1x8x128xf32>
    %243 = vector.shape_cast %242 : vector<1x8x128xf32> to vector<8x128xf32>
    %244 = arith.addf %243, %2 : vector<8x128xf32>
    %c0_71 = arith.constant 0 : index
    %c0_72 = arith.constant 0 : index
    %245 = vector.load %arg3[%c0_71, %c0_72] : memref<32x128xf32, #tpu.memory_space<vmem>>, vector<32x128xf32>
    %cst_73 = arith.constant dense<0.000000e+00> : vector<8x128xf32>
    %246 = tpu.matmul %240, %245, %cst_73 {dimension_numbers = #tpu.dot_dimension_numbers<[1], [0], [0], [1], [0, 0, 1, 1], [], []>} : vector<8x32xf32>, vector<32x128xf32>, vector<8x128xf32> -> vector<8x128xf32>
    %247 = arith.addf %244, %246 : vector<8x128xf32>
    %248 = vector.extract_strided_slice %247 {offsets = [0, 0], sizes = [8, 32], strides = [1, 1]} : vector<8x128xf32> to vector<8x32xf32>
    %249 = arith.negf %248 : vector<8x32xf32>
    %250 = math.exp %249 : vector<8x32xf32>
    %cst_74 = arith.constant 1.000000e+00 : f32
    %251 = vector.broadcast %cst_74 : f32 to vector<8x32xf32>
    %252 = arith.addf %251, %250 : vector<8x32xf32>
    %253 = arith.divf %251, %252 : vector<8x32xf32>
    %254 = vector.extract_strided_slice %247 {offsets = [0, 32], sizes = [8, 32], strides = [1, 1]} : vector<8x128xf32> to vector<8x32xf32>
    %255 = arith.negf %254 : vector<8x32xf32>
    %256 = math.exp %255 : vector<8x32xf32>
    %cst_75 = arith.constant 1.000000e+00 : f32
    %257 = vector.broadcast %cst_75 : f32 to vector<8x32xf32>
    %258 = arith.addf %257, %256 : vector<8x32xf32>
    %259 = arith.divf %257, %258 : vector<8x32xf32>
    %260 = vector.extract_strided_slice %247 {offsets = [0, 64], sizes = [8, 32], strides = [1, 1]} : vector<8x128xf32> to vector<8x32xf32>
    %261 = math.tanh %260 : vector<8x32xf32>
    %262 = vector.extract_strided_slice %247 {offsets = [0, 96], sizes = [8, 32], strides = [1, 1]} : vector<8x128xf32> to vector<8x32xf32>
    %263 = arith.negf %262 : vector<8x32xf32>
    %264 = math.exp %263 : vector<8x32xf32>
    %cst_76 = arith.constant 1.000000e+00 : f32
    %265 = vector.broadcast %cst_76 : f32 to vector<8x32xf32>
    %266 = arith.addf %265, %264 : vector<8x32xf32>
    %267 = arith.divf %265, %266 : vector<8x32xf32>
    %268 = arith.mulf %259, %238 : vector<8x32xf32>
    %269 = arith.mulf %253, %261 : vector<8x32xf32>
    %270 = arith.addf %268, %269 : vector<8x32xf32>
    %271 = math.tanh %270 : vector<8x32xf32>
    %272 = arith.mulf %267, %271 : vector<8x32xf32>
    %c8_i32 = arith.constant 8 : i32
    %c0_77 = arith.constant 0 : index
    %c0_78 = arith.constant 0 : index
    %273 = vector.load %arg5[%c0_77, %c0_78] : memref<32x128xf32, #tpu.memory_space<vmem>>, vector<32x128xf32>
    %cst_79 = arith.constant dense<0.000000e+00> : vector<8x128xf32>
    %274 = tpu.matmul %272, %273, %cst_79 {dimension_numbers = #tpu.dot_dimension_numbers<[1], [0], [0], [1], [0, 0, 1, 1], [], []>} : vector<8x32xf32>, vector<32x128xf32>, vector<8x128xf32> -> vector<8x128xf32>
    %c0_80 = arith.constant 0 : index
    %c0_81 = arith.constant 0 : index
    %275 = vector.load %arg6[%c0_80, %c0_81] : memref<8x128xf32, #tpu.memory_space<vmem>>, vector<8x128xf32>
    tpu.vector_store %arg6[%c0_80, %c0_81], %274 {strides = array<i32>} : memref<8x128xf32, #tpu.memory_space<vmem>>, vector<8x128xf32>,
    return
  }
}

</mosaic_0001>

<llo_original>
// kernel: tpu_custom_call.1
$region0: #{tpu_custom_call.1}
  #allocation0 [shape = 'u32[]', space=smem, size = 0x4, offset = 0x4, fixed_abs, tag = 'smem constant byte address 0x4 - core index']
  #allocation1 [shape = 'u32[144,128]{1,0:T(1,128)}', space=vmem, size = 0x12000, scoped, tag = 'internal scratch']
  #allocation2 [shape = 'f32[8,8,128]{2,1,0:T(8,128)}', space=vmem, size = 0x8000, scoped, tag = 'scratch operand']
  %s0 = inlined_call_operand.vmem [shape: s32[64,1], index: 0, kind: input, shape index: {}]
  %s1 = inlined_call_operand.vmem [shape: f32[128,32], index: 1, kind: input, shape index: {}]
  %s2 = inlined_call_operand.vmem [shape: f32[32,128], index: 2, kind: input, shape index: {}]
  %s3 = inlined_call_operand.vmem [shape: f32[32,128], index: 3, kind: input, shape index: {}]
  %s4 = inlined_call_operand.vmem [shape: f32[1,128], index: 4, kind: input, shape index: {}]
  %s5 = inlined_call_operand.vmem [shape: f32[32,128], index: 5, kind: input, shape index: {}]
  %s6 = inlined_call_operand.hbm [shape: f32[8,128], index: 6, kind: output, shape index: {}]
  %s7 = sld [smem:[#allocation0]]
  $region34: #{tpu_custom_call.1} parent=0
    _
  %s9 = ssub.s32 1, %s7
  %s10 = scalar_select 0, %s9, %s7
  $region1: #{tpu_custom_call.1} parent=0
    #allocation3 [shape = 'u8[4096]{0}', space=vmem, size = 0x1000, scoped, tag = 'output window, operand 0, single buffered']
    #allocation4 [shape = 's32[1]{0}', space=sflag, size = 0x4, scoped, tag = 'scoped memory for tpu_custom_call.1']
    %11 = vsyncpa [#allocation4], 0
    // Predicated region
    $region2: #{tpu_custom_call.1} parent=1 // pred_check
      _
    $region3: #{tpu_custom_call.1} parent=1 // pred_check_branch
      %13 = sbr.rel (0) target = $region5
    $region4: #{tpu_custom_call.1} parent=1 // pred_region
      _
    $region5: #{tpu_custom_call.1} parent=1 // pred_fallthru
      _
    // Predicated region
    $region6: #{tpu_custom_call.1} parent=1 // pred_check
      _
    $region7: #{tpu_custom_call.1} parent=1 // pred_check_branch
      %15 = sbr.rel (0) target = $region9
    $region8: #{tpu_custom_call.1} parent=1 // pred_region
      _
    $region9: #{tpu_custom_call.1} parent=1 // pred_fallthru
      _
    // Predicated region
    $region10: #{tpu_custom_call.1} parent=1 // pred_check
      _
    $region11: #{tpu_custom_call.1} parent=1 // pred_check_branch
      %17 = sbr.rel (0) target = $region13
    $region12: #{tpu_custom_call.1} parent=1 // pred_region
      _
    $region13: #{tpu_custom_call.1} parent=1 // pred_fallthru
      _
    // Predicated region
    $region14: #{tpu_custom_call.1} parent=1 // pred_check
      _
    $region15: #{tpu_custom_call.1} parent=1 // pred_check_branch
      %19 = sbr.rel (0) target = $region17
    $region16: #{tpu_custom_call.1} parent=1 // pred_region
      _
    $region17: #{tpu_custom_call.1} parent=1 // pred_fallthru
      _
    // Predicated region
    $region18: #{tpu_custom_call.1} parent=1 // pred_check
      _
    $region19: #{tpu_custom_call.1} parent=1 // pred_check_branch
      %21 = sbr.rel (0) target = $region21
    $region20: #{tpu_custom_call.1} parent=1 // pred_region
      _
    $region21: #{tpu_custom_call.1} parent=1 // pred_fallthru
      _
    // Predicated region
    $region22: #{tpu_custom_call.1} parent=1 // pred_check
      _
    $region23: #{tpu_custom_call.1} parent=1 // pred_check_branch
      %23 = sbr.rel (0) target = $region25
    $region24: #{tpu_custom_call.1} parent=1 // pred_region
      _
    $region25: #{tpu_custom_call.1} parent=1 // pred_fallthru
      _
    %v24 = vld [vmem:[%s4] sm:$0x1]
    %v26 = vlaneseq
    %v27 = vshrl.u32 %v26, 7
    %v28 = vsub.s32 0, %v27
    %v29 = vrot.slane %v24, %v28
    %v31 = vld [vmem:[%s0] sm:$0xff]
    %v32 = vld [vmem:[%s0 + $0x8] sm:$0xff]
    %v33 = vld [vmem:[%s0 + $0x10] sm:$0xff]
    %v34 = vld [vmem:[%s0 + $0x18] sm:$0xff]
    %v35 = vld [vmem:[%s0 + $0x20] sm:$0xff]
    %v36 = vld [vmem:[%s0 + $0x28] sm:$0xff]
    %v37 = vld [vmem:[%s0 + $0x30] sm:$0xff]
    %v38 = vld [vmem:[%s0 + $0x38] sm:$0xff]
    %v39 = vlaneseq
    %v40 = vand.u32 %v39, 127
    %41 = vset.pattern.permute.xlu0 0
    %42 = vperm.xlu0 %41, %v31
    %v43 = vpop.permute.xlu0 %42
    %44 = vset.pattern.permute.xlu0 0
    %45 = vperm.xlu0 %44, %v32
    %v46 = vpop.permute.xlu0 %45
    %47 = vset.pattern.permute.xlu0 0
    %48 = vperm.xlu0 %47, %v33
    %v49 = vpop.permute.xlu0 %48
    %50 = vset.pattern.permute.xlu0 0
    %51 = vperm.xlu0 %50, %v34
    %v52 = vpop.permute.xlu0 %51
    %53 = vset.pattern.permute.xlu0 0
    %54 = vperm.xlu0 %53, %v35
    %v55 = vpop.permute.xlu0 %54
    %56 = vset.pattern.permute.xlu0 0
    %57 = vperm.xlu0 %56, %v36
    %v58 = vpop.permute.xlu0 %57
    %59 = vset.pattern.permute.xlu0 0
    %60 = vperm.xlu0 %59, %v37
    %v61 = vpop.permute.xlu0 %60
    %62 = vset.pattern.permute.xlu0 0
    %63 = vperm.xlu0 %62, %v38
    %v64 = vpop.permute.xlu0 %63
    %vm65 = vcmp.eq.s32.totalorder %v40, %v43
    %vm66 = vcmp.eq.s32.totalorder %v40, %v46
    %vm67 = vcmp.eq.s32.totalorder %v40, %v49
    %vm68 = vcmp.eq.s32.totalorder %v40, %v52
    %vm69 = vcmp.eq.s32.totalorder %v40, %v55
    %vm70 = vcmp.eq.s32.totalorder %v40, %v58
    %vm71 = vcmp.eq.s32.totalorder %v40, %v61
    %vm72 = vcmp.eq.s32.totalorder %v40, %v64
    %v73 = vsel %vm65, 1, 0
    %v74 = vsel %vm66, 1, 0
    %v75 = vsel %vm67, 1, 0
    %v76 = vsel %vm68, 1, 0
    %v77 = vsel %vm69, 1, 0
    %v78 = vsel %vm70, 1, 0
    %v79 = vsel %vm71, 1, 0
    %v80 = vsel %vm72, 1, 0
    %v81 = vcvt.s32.f32 %v73
    %v82 = vcvt.s32.f32 %v74
    %v83 = vcvt.s32.f32 %v75
    %v84 = vcvt.s32.f32 %v76
    %v85 = vcvt.s32.f32 %v77
    %v86 = vcvt.s32.f32 %v78
    %v87 = vcvt.s32.f32 %v79
    %v88 = vcvt.s32.f32 %v80
    %v89 = vld [vmem:[%s1] sm:$0xff]
    %v90 = vld [vmem:[%s1 + $0x8] sm:$0xff]
    %v91 = vld [vmem:[%s1 + $0x10] sm:$0xff]
    %v92 = vld [vmem:[%s1 + $0x18] sm:$0xff]
    %v93 = vld [vmem:[%s1 + $0x20] sm:$0xff]
    %v94 = vld [vmem:[%s1 + $0x28] sm:$0xff]
    %v95 = vld [vmem:[%s1 + $0x30] sm:$0xff]
    %v96 = vld [vmem:[%s1 + $0x38] sm:$0xff]
    %v97 = vld [vmem:[%s1 + $0x40] sm:$0xff]
    %v98 = vld [vmem:[%s1 + $0x48] sm:$0xff]
    %v99 = vld [vmem:[%s1 + $0x50] sm:$0xff]
    %v100 = vld [vmem:[%s1 + $0x58] sm:$0xff]
    %v101 = vld [vmem:[%s1 + $0x60] sm:$0xff]
    %v102 = vld [vmem:[%s1 + $0x68] sm:$0xff]
    %v103 = vld [vmem:[%s1 + $0x70] sm:$0xff]
    %v104 = vld [vmem:[%s1 + $0x78] sm:$0xff]
    %105 = vmatprep.subr.mxu0 0.0
    %106 = vmatpush1.msra.mxu0 %v89
    %107 = vmatprep.subr.mxu0 0.0
    %108 = vmatpush1.msra.mxu0 %v90
    %109 = vmatprep.subr.mxu0 0.0
    %110 = vmatpush1.msra.mxu0 %v91
    %111 = vmatprep.subr.mxu0 0.0
    %112 = vmatpush1.msra.mxu0 %v92
    %113 = vmatprep.subr.mxu0 0.0
    %114 = vmatpush1.msra.mxu0 %v93
    %115 = vmatprep.subr.mxu0 0.0
    %116 = vmatpush1.msra.mxu0 %v94
    %117 = vmatprep.subr.mxu0 0.0
    %118 = vmatpush1.msra.mxu0 %v95
    %119 = vmatprep.subr.mxu0 0.0
    %120 = vmatpush1.msra.mxu0 %v96
    %121 = vmatprep.subr.mxu0 0.0
    %122 = vmatpush1.msra.mxu0 %v97
    %123 = vmatprep.subr.mxu0 0.0
    %124 = vmatpush1.msra.mxu0 %v98
    %125 = vmatprep.subr.mxu0 0.0
    %126 = vmatpush1.msra.mxu0 %v99
    %127 = vmatprep.subr.mxu0 0.0
    %128 = vmatpush1.msra.mxu0 %v100
    %129 = vmatprep.subr.mxu0 0.0
    %130 = vmatpush1.msra.mxu0 %v101
    %131 = vmatprep.subr.mxu0 0.0
    %132 = vmatpush1.msra.mxu0 %v102
    %133 = vmatprep.subr.mxu0 0.0
    %134 = vmatpush1.msra.mxu0 %v103
    %135 = vmatprep.subr.mxu0 0.0
    %136 = vmatpush1.msra.mxu0 %v104
    %137 = vmatprep.subr.mxu0 0.0
    %138 = vmatpush1.msra.mxu0 0.0
    %139 = vmatprep.subr.mxu0 0.0
    %140 = vmatpush1.msra.mxu0 0.0
    %141 = vmatprep.subr.mxu0 0.0
    %142 = vmatpush1.msra.mxu0 0.0
    %143 = vmatprep.subr.mxu0 0.0
    %144 = vmatpush1.msra.mxu0 0.0
    %145 = vmatprep.subr.mxu0 0.0
    %146 = vmatpush1.msra.mxu0 0.0
    %147 = vmatprep.subr.mxu0 0.0
    %148 = vmatpush1.msra.mxu0 0.0
    %149 = vmatprep.subr.mxu0 0.0
    %150 = vmatpush1.msra.mxu0 0.0
    %151 = vmatprep.subr.mxu0 0.0
    %152 = vmatpush1.msra.mxu0 0.0
    %153 = vmatprep.subr.mxu0 0.0
    %154 = vmatpush1.msra.mxu0 0.0
    %155 = vmatprep.subr.mxu0 0.0
    %156 = vmatpush1.msra.mxu0 0.0
    %157 = vmatprep.subr.mxu0 0.0
    %158 = vmatpush1.msra.mxu0 0.0
    %159 = vmatprep.subr.mxu0 0.0
    %160 = vmatpush1.msra.mxu0 0.0
    %161 = vmatprep.subr.mxu0 0.0
    %162 = vmatpush1.msra.mxu0 0.0
    %163 = vmatprep.subr.mxu0 0.0
    %164 = vmatpush1.msra.mxu0 0.0
    %165 = vmatprep.subr.mxu0 0.0
    %166 = vmatpush1.msra.mxu0 0.0
    %167 = vmatprep.subr.mxu0 0.0
    %168 = vmatpush1.msra.mxu0 0.0
    %169 = vmatprep.mubr.f32.mxu0 0.0
    %170 = vmatmul.mubr.f32.gmra.mrb[0].mxu0 %v81
    %v171 = vpop.f32.mrb[0].mxu0
    %v172 = vadd.f32 0.0, %v171
    %v173 = vpop.f32.mrb[0].mxu0
    %174 = vmatprep.mubr.f32.mxu0 0.0
    %175 = vmatmul.mubr.f32.gmra.mrb[0].mxu0 %v82
    %v176 = vpop.f32.mrb[0].mxu0
    %v177 = vadd.f32 0.0, %v176
    %v178 = vpop.f32.mrb[0].mxu0
    %179 = vmatprep.mubr.f32.mxu0 0.0
    %180 = vmatmul.mubr.f32.gmra.mrb[0].mxu0 %v83
    %v181 = vpop.f32.mrb[0].mxu0
    %v182 = vadd.f32 0.0, %v181
    %v183 = vpop.f32.mrb[0].mxu0
    %184 = vmatprep.mubr.f32.mxu0 0.0
    %185 = vmatmul.mubr.f32.gmra.mrb[0].mxu0 %v84
    %v186 = vpop.f32.mrb[0].mxu0
    %v187 = vadd.f32 0.0, %v186
    %v188 = vpop.f32.mrb[0].mxu0
    %189 = vmatprep.mubr.f32.mxu0 0.0
    %190 = vmatmul.mubr.f32.gmra.mrb[0].mxu0 %v85
    %v191 = vpop.f32.mrb[0].mxu0
    %v192 = vadd.f32 0.0, %v191
    %v193 = vpop.f32.mrb[0].mxu0
    %194 = vmatprep.mubr.f32.mxu0 0.0
    %195 = vmatmul.mubr.f32.gmra.mrb[0].mxu0 %v86
    %v196 = vpop.f32.mrb[0].mxu0
    %v197 = vadd.f32 0.0, %v196
    %v198 = vpop.f32.mrb[0].mxu0
    %199 = vmatprep.mubr.f32.mxu0 0.0
    %200 = vmatmul.mubr.f32.gmra.mrb[0].mxu0 %v87
    %v201 = vpop.f32.mrb[0].mxu0
    %v202 = vadd.f32 0.0, %v201
    %v203 = vpop.f32.mrb[0].mxu0
    %204 = vmatprep.mubr.f32.mxu0 0.0
    %205 = vmatmul.mubr.f32.gmra.mrb[0].mxu0 %v88
    %v206 = vpop.f32.mrb[0].mxu0
    %v207 = vadd.f32 0.0, %v206
    %v208 = vpop.f32.mrb[0].mxu0
    %209 = vdwg.mxu0
    %v210 = vld [vmem:[%s2] sm:$0xff]
    %v211 = vld [vmem:[%s2 + $0x8] sm:$0xff]
    %v212 = vld [vmem:[%s2 + $0x10] sm:$0xff]
    %v213 = vld [vmem:[%s2 + $0x18] sm:$0xff]
    %vm214 = vcmask 261120
    %v216 = vsel %vm214, %v172, 0
    %v219 = vsel %vm214, %v177, 0
    %v222 = vsel %vm214, %v182, 0
    %v225 = vsel %vm214, %v187, 0
    %v228 = vsel %vm214, %v192, 0
    %v231 = vsel %vm214, %v197, 0
    %v234 = vsel %vm214, %v202, 0
    %v237 = vsel %vm214, %v207, 0
    %239 = vmatprep.subr.mxu0 0.0
    %240 = vmatpush1.msra.mxu0 %v210
    %241 = vmatprep.subr.mxu0 0.0
    %242 = vmatpush1.msra.mxu0 %v211
    %243 = vmatprep.subr.mxu0 0.0
    %244 = vmatpush1.msra.mxu0 %v212
    %245 = vmatprep.subr.mxu0 0.0
    %246 = vmatpush1.msra.mxu0 %v213
    %247 = vmatprep.subr.mxu0 0.0
    %248 = vmatpush1.msra.mxu0 0.0
    %249 = vmatprep.subr.mxu0 0.0
    %250 = vmatpush1.msra.mxu0 0.0
    %251 = vmatprep.subr.mxu0 0.0
    %252 = vmatpush1.msra.mxu0 0.0
    %253 = vmatprep.subr.mxu0 0.0
    %254 = vmatpush1.msra.mxu0 0.0
    %255 = vmatprep.subr.mxu0 0.0
    %256 = vmatpush1.msra.mxu0 0.0
    %257 = vmatprep.subr.mxu0 0.0
    %258 = vmatpush1.msra.mxu0 0.0
    %259 = vmatprep.subr.mxu0 0.0
    %260 = vmatpush1.msra.mxu0 0.0
    %261 = vmatprep.subr.mxu0 0.0
    %262 = vmatpush1.msra.mxu0 0.0
    %263 = vmatprep.subr.mxu0 0.0
    %264 = vmatpush1.msra.mxu0 0.0
    %265 = vmatprep.subr.mxu0 0.0
    %266 = vmatpush1.msra.mxu0 0.0
    %267 = vmatprep.subr.mxu0 0.0
    %268 = vmatpush1.msra.mxu0 0.0
    %269 = vmatprep.subr.mxu0 0.0
    %270 = vmatpush1.msra.mxu0 0.0
    %271 = vmatprep.subr.mxu0 0.0
    %272 = vmatpush1.msra.mxu0 0.0
    %273 = vmatprep.subr.mxu0 0.0
    %274 = vmatpush1.msra.mxu0 0.0
    %275 = vmatprep.subr.mxu0 0.0
    %276 = vmatpush1.msra.mxu0 0.0
    %277 = vmatprep.subr.mxu0 0.0
    %278 = vmatpush1.msra.mxu0 0.0
    %279 = vmatprep.subr.mxu0 0.0
    %280 = vmatpush1.msra.mxu0 0.0
    %281 = vmatprep.subr.mxu0 0.0
    %282 = vmatpush1.msra.mxu0 0.0
    %283 = vmatprep.subr.mxu0 0.0
    %284 = vmatpush1.msra.mxu0 0.0
    %285 = vmatprep.subr.mxu0 0.0
    %286 = vmatpush1.msra.mxu0 0.0
    %287 = vmatprep.subr.mxu0 0.0
    %288 = vmatpush1.msra.mxu0 0.0
    %289 = vmatprep.subr.mxu0 0.0
    %290 = vmatpush1.msra.mxu0 0.0
    %291 = vmatprep.subr.mxu0 0.0
    %292 = vmatpush1.msra.mxu0 0.0
    %293 = vmatprep.subr.mxu0 0.0
    %294 = vmatpush1.msra.mxu0 0.0
    %295 = vmatprep.subr.mxu0 0.0
    %296 = vmatpush1.msra.mxu0 0.0
    %297 = vmatprep.subr.mxu0 0.0
    %298 = vmatpush1.msra.mxu0 0.0
    %299 = vmatprep.subr.mxu0 0.0
    %300 = vmatpush1.msra.mxu0 0.0
    %301 = vmatprep.subr.mxu0 0.0
    %302 = vmatpush1.msra.mxu0 0.0
    %303 = vmatprep.mubr.f32.mxu0 0.0
    %304 = vmatmul.mubr.f32.gmra.mrb[0].mxu0 %v216
    %v305 = vpop.f32.mrb[0].mxu0
    %v306 = vadd.f32 0.0, %v305
    %v307 = vpop.f32.mrb[0].mxu0
    %308 = vmatprep.mubr.f32.mxu0 0.0
    %309 = vmatmul.mubr.f32.gmra.mrb[0].mxu0 %v219
    %v310 = vpop.f32.mrb[0].mxu0
    %v311 = vadd.f32 0.0, %v310
    %v312 = vpop.f32.mrb[0].mxu0
    %313 = vmatprep.mubr.f32.mxu0 0.0
    %314 = vmatmul.mubr.f32.gmra.mrb[0].mxu0 %v222
    %v315 = vpop.f32.mrb[0].mxu0
    %v316 = vadd.f32 0.0, %v315
    %v317 = vpop.f32.mrb[0].mxu0
    %318 = vmatprep.mubr.f32.mxu0 0.0
    %319 = vmatmul.mubr.f32.gmra.mrb[0].mxu0 %v225
    %v320 = vpop.f32.mrb[0].mxu0
    %v321 = vadd.f32 0.0, %v320
    %v322 = vpop.f32.mrb[0].mxu0
    %323 = vmatprep.mubr.f32.mxu0 0.0
    %324 = vmatmul.mubr.f32.gmra.mrb[0].mxu0 %v228
    %v325 = vpop.f32.mrb[0].mxu0
    %v326 = vadd.f32 0.0, %v325
    %v327 = vpop.f32.mrb[0].mxu0
    %328 = vmatprep.mubr.f32.mxu0 0.0
    %329 = vmatmul.mubr.f32.gmra.mrb[0].mxu0 %v231
    %v330 = vpop.f32.mrb[0].mxu0
    %v331 = vadd.f32 0.0, %v330
    %v332 = vpop.f32.mrb[0].mxu0
    %333 = vmatprep.mubr.f32.mxu0 0.0
    %334 = vmatmul.mubr.f32.gmra.mrb[0].mxu0 %v234
    %v335 = vpop.f32.mrb[0].mxu0
    %v336 = vadd.f32 0.0, %v335
    %v337 = vpop.f32.mrb[0].mxu0
    %338 = vmatprep.mubr.f32.mxu0 0.0
    %339 = vmatmul.mubr.f32.gmra.mrb[0].mxu0 %v237
    %v340 = vpop.f32.mrb[0].mxu0
    %v341 = vadd.f32 0.0, %v340
    %v342 = vpop.f32.mrb[0].mxu0
    %343 = vdwg.mxu0
    %344 = vst [vmem:[#allocation2] sm:$0xff] %v306
    %345 = vst [vmem:[#allocation2 + $0x8] sm:$0xff] %v311
    %346 = vst [vmem:[#allocation2 + $0x10] sm:$0xff] %v316
    %347 = vst [vmem:[#allocation2 + $0x18] sm:$0xff] %v321
    %348 = vst [vmem:[#allocation2 + $0x20] sm:$0xff] %v326
    %349 = vst [vmem:[#allocation2 + $0x28] sm:$0xff] %v331
    %350 = vst [vmem:[#allocation2 + $0x30] sm:$0xff] %v336
    %351 = vst [vmem:[#allocation2 + $0x38] sm:$0xff] %v341
    %v352 = vld [vmem:[#allocation2] sm:$0xff]
    %v353 = vadd.f32 %v352, %v29
    %v354 = vld [vmem:[%s3] sm:$0xff]
    %v355 = vld [vmem:[%s3 + $0x8] sm:$0xff]
    %v356 = vld [vmem:[%s3 + $0x10] sm:$0xff]
    %v357 = vld [vmem:[%s3 + $0x18] sm:$0xff]
    %v359 = vsel %vm214, 0.0, 0
    %361 = vmatprep.subr.mxu0 0.0
    %362 = vmatpush1.msra.mxu0 %v354
    %363 = vmatprep.subr.mxu0 0.0
    %364 = vmatpush1.msra.mxu0 %v355
    %365 = vmatprep.subr.mxu0 0.0
    %366 = vmatpush1.msra.mxu0 %v356
    %367 = vmatprep.subr.mxu0 0.0
    %368 = vmatpush1.msra.mxu0 %v357
    %369 = vmatprep.subr.mxu0 0.0
    %370 = vmatpush1.msra.mxu0 0.0
    %371 = vmatprep.subr.mxu0 0.0
    %372 = vmatpush1.msra.mxu0 0.0
    %373 = vmatprep.subr.mxu0 0.0
    %374 = vmatpush1.msra.mxu0 0.0
    %375 = vmatprep.subr.mxu0 0.0
    %376 = vmatpush1.msra.mxu0 0.0
    %377 = vmatprep.subr.mxu0 0.0
    %378 = vmatpush1.msra.mxu0 0.0
    %379 = vmatprep.subr.mxu0 0.0
    %380 = vmatpush1.msra.mxu0 0.0
    %381 = vmatprep.subr.mxu0 0.0
    %382 = vmatpush1.msra.mxu0 0.0
    %383 = vmatprep.subr.mxu0 0.0
    %384 = vmatpush1.msra.mxu0 0.0
    %385 = vmatprep.subr.mxu0 0.0
    %386 = vmatpush1.msra.mxu0 0.0
    %387 = vmatprep.subr.mxu0 0.0
    %388 = vmatpush1.msra.mxu0 0.0
    %389 = vmatprep.subr.mxu0 0.0
    %390 = vmatpush1.msra.mxu0 0.0
    %391 = vmatprep.subr.mxu0 0.0
    %392 = vmatpush1.msra.mxu0 0.0
    %393 = vmatprep.subr.mxu0 0.0
    %394 = vmatpush1.msra.mxu0 0.0
    %395 = vmatprep.subr.mxu0 0.0
    %396 = vmatpush1.msra.mxu0 0.0
    %397 = vmatprep.subr.mxu0 0.0
    %398 = vmatpush1.msra.mxu0 0.0
    %399 = vmatprep.subr.mxu0 0.0
    %400 = vmatpush1.msra.mxu0 0.0
    %401 = vmatprep.subr.mxu0 0.0
    %402 = vmatpush1.msra.mxu0 0.0
    %403 = vmatprep.subr.mxu0 0.0
    %404 = vmatpush1.msra.mxu0 0.0
    %405 = vmatprep.subr.mxu0 0.0
    %406 = vmatpush1.msra.mxu0 0.0
    %407 = vmatprep.subr.mxu0 0.0
    %408 = vmatpush1.msra.mxu0 0.0
    %409 = vmatprep.subr.mxu0 0.0
    %410 = vmatpush1.msra.mxu0 0.0
    %411 = vmatprep.subr.mxu0 0.0
    %412 = vmatpush1.msra.mxu0 0.0
    %413 = vmatprep.subr.mxu0 0.0
    %414 = vmatpush1.msra.mxu0 0.0
    %415 = vmatprep.subr.mxu0 0.0
    %416 = vmatpush1.msra.mxu0 0.0
    %417 = vmatprep.subr.mxu0 0.0
    %418 = vmatpush1.msra.mxu0 0.0
    %419 = vmatprep.subr.mxu0 0.0
    %420 = vmatpush1.msra.mxu0 0.0
    %421 = vmatprep.subr.mxu0 0.0
    %422 = vmatpush1.msra.mxu0 0.0
    %423 = vmatprep.subr.mxu0 0.0
    %424 = vmatpush1.msra.mxu0 0.0
    %425 = vmatprep.mubr.f32.mxu0 0.0
    %426 = vmatmul.mubr.f32.gmra.mrb[0].mxu0 %v359
    %v427 = vpop.f32.mrb[0].mxu0
    %v428 = vadd.f32 0.0, %v427
    %v429 = vpop.f32.mrb[0].mxu0
    %430 = vdwg.mxu0
    %v431 = vadd.f32 %v353, %v428
    %v432 = vxor.u32 %v431, 2147483648
    %v433 = vmul.f32 %v432, 1.442695
    %v434 = vpow.pop %v433
    %v435 = vadd.f32 %v434, 1.0
    %v436 = vrcp.pop %v435
    %v437 = vmul.f32 1.0, %v436
    %v438 = vtanh.pop %v431
    %v439 = vmul.f32 %v437, 0.0
    %441 = vrot.lane.b32.xlu0 %v438, 64
    %v442 = vpop.permute.xlu0 %441
    %v444 = vmul.f32 %v437, %v442
    %446 = vrot.lane.b32.xlu0 %v444, 32
    %v447 = vpop.permute.xlu0 %446
    %v449 = vadd.f32 %v439, %v447
    %v450 = vtanh.pop %v449
    %452 = vrot.lane.b32.xlu0 %v450, 64
    %v453 = vpop.permute.xlu0 %452
    %v455 = vmul.f32 %v437, %v453
    %s456 = scalar_lea.vmem [#allocation2], 8
    %v457 = vld [vmem:[%s456] sm:$0xff]
    %v458 = vadd.f32 %v457, %v29
    %460 = vrot.lane.b32.xlu0 %v455, 32
    %v461 = vpop.permute.xlu0 %460
    %v462 = vsel %vm214, %v461, 0
    %464 = vmatprep.subr.mxu0 0.0
    %465 = vmatpush1.msra.mxu0 %v354
    %466 = vmatprep.subr.mxu0 0.0
    %467 = vmatpush1.msra.mxu0 %v355
    %468 = vmatprep.subr.mxu0 0.0
    %469 = vmatpush1.msra.mxu0 %v356
    %470 = vmatprep.subr.mxu0 0.0
    %471 = vmatpush1.msra.mxu0 %v357
    %472 = vmatprep.subr.mxu0 0.0
    %473 = vmatpush1.msra.mxu0 0.0
    %474 = vmatprep.subr.mxu0 0.0
    %475 = vmatpush1.msra.mxu0 0.0
    %476 = vmatprep.subr.mxu0 0.0
    %477 = vmatpush1.msra.mxu0 0.0
    %478 = vmatprep.subr.mxu0 0.0
    %479 = vmatpush1.msra.mxu0 0.0
    %480 = vmatprep.subr.mxu0 0.0
    %481 = vmatpush1.msra.mxu0 0.0
    %482 = vmatprep.subr.mxu0 0.0
    %483 = vmatpush1.msra.mxu0 0.0
    %484 = vmatprep.subr.mxu0 0.0
    %485 = vmatpush1.msra.mxu0 0.0
    %486 = vmatprep.subr.mxu0 0.0
    %487 = vmatpush1.msra.mxu0 0.0
    %488 = vmatprep.subr.mxu0 0.0
    %489 = vmatpush1.msra.mxu0 0.0
    %490 = vmatprep.subr.mxu0 0.0
    %491 = vmatpush1.msra.mxu0 0.0
    %492 = vmatprep.subr.mxu0 0.0
    %493 = vmatpush1.msra.mxu0 0.0
    %494 = vmatprep.subr.mxu0 0.0
    %495 = vmatpush1.msra.mxu0 0.0
    %496 = vmatprep.subr.mxu0 0.0
    %497 = vmatpush1.msra.mxu0 0.0
    %498 = vmatprep.subr.mxu0 0.0
    %499 = vmatpush1.msra.mxu0 0.0
    %500 = vmatprep.subr.mxu0 0.0
    %501 = vmatpush1.msra.mxu0 0.0
    %502 = vmatprep.subr.mxu0 0.0
    %503 = vmatpush1.msra.mxu0 0.0
    %504 = vmatprep.subr.mxu0 0.0
    %505 = vmatpush1.msra.mxu0 0.0
    %506 = vmatprep.subr.mxu0 0.0
    %507 = vmatpush1.msra.mxu0 0.0
    %508 = vmatprep.subr.mxu0 0.0
    %509 = vmatpush1.msra.mxu0 0.0
    %510 = vmatprep.subr.mxu0 0.0
    %511 = vmatpush1.msra.mxu0 0.0
    %512 = vmatprep.subr.mxu0 0.0
    %513 = vmatpush1.msra.mxu0 0.0
    %514 = vmatprep.subr.mxu0 0.0
    %515 = vmatpush1.msra.mxu0 0.0
    %516 = vmatprep.subr.mxu0 0.0
    %517 = vmatpush1.msra.mxu0 0.0
    %518 = vmatprep.subr.mxu0 0.0
    %519 = vmatpush1.msra.mxu0 0.0
    %520 = vmatprep.subr.mxu0 0.0
    %521 = vmatpush1.msra.mxu0 0.0
    %522 = vmatprep.subr.mxu0 0.0
    %523 = vmatpush1.msra.mxu0 0.0
    %524 = vmatprep.subr.mxu0 0.0
    %525 = vmatpush1.msra.mxu0 0.0
    %526 = vmatprep.subr.mxu0 0.0
    %527 = vmatpush1.msra.mxu0 0.0
    %528 = vmatprep.mubr.f32.mxu0 0.0
    %529 = vmatmul.mubr.f32.gmra.mrb[0].mxu0 %v462
    %v530 = vpop.f32.mrb[0].mxu0
    %v531 = vadd.f32 0.0, %v530
    %v532 = vpop.f32.mrb[0].mxu0
    %533 = vdwg.mxu0
    %v534 = vadd.f32 %v458, %v531
    %v535 = vxor.u32 %v534, 2147483648
    %v536 = vmul.f32 %v535, 1.442695
    %v537 = vpow.pop %v536
    %v538 = vadd.f32 %v537, 1.0
    %v539 = vrcp.pop %v538
    %v540 = vmul.f32 1.0, %v539
    %v541 = vtanh.pop %v534
    %v542 = vmul.f32 %v540, %v449
    %544 = vrot.lane.b32.xlu0 %v541, 64
    %v545 = vpop.permute.xlu0 %544
    %v547 = vmul.f32 %v540, %v545
    %549 = vrot.lane.b32.xlu0 %v547, 32
    %v550 = vpop.permute.xlu0 %549
    %v552 = vadd.f32 %v542, %v550
    %v553 = vtanh.pop %v552
    %555 = vrot.lane.b32.xlu0 %v553, 64
    %v556 = vpop.permute.xlu0 %555
    %v558 = vmul.f32 %v540, %v556
    %s559 = scalar_lea.vmem [#allocation2], 16
    %v560 = vld [vmem:[%s559] sm:$0xff]
    %v561 = vadd.f32 %v560, %v29
    %563 = vrot.lane.b32.xlu0 %v558, 32
    %v564 = vpop.permute.xlu0 %563
    %v565 = vsel %vm214, %v564, 0
    %567 = vmatprep.subr.mxu0 0.0
    %568 = vmatpush1.msra.mxu0 %v354
    %569 = vmatprep.subr.mxu0 0.0
    %570 = vmatpush1.msra.mxu0 %v355
    %571 = vmatprep.subr.mxu0 0.0
    %572 = vmatpush1.msra.mxu0 %v356
    %573 = vmatprep.subr.mxu0 0.0
    %574 = vmatpush1.msra.mxu0 %v357
    %575 = vmatprep.subr.mxu0 0.0
    %576 = vmatpush1.msra.mxu0 0.0
    %577 = vmatprep.subr.mxu0 0.0
    %578 = vmatpush1.msra.mxu0 0.0
    %579 = vmatprep.subr.mxu0 0.0
    %580 = vmatpush1.msra.mxu0 0.0
    %581 = vmatprep.subr.mxu0 0.0
    %582 = vmatpush1.msra.mxu0 0.0
    %583 = vmatprep.subr.mxu0 0.0
    %584 = vmatpush1.msra.mxu0 0.0
    %585 = vmatprep.subr.mxu0 0.0
    %586 = vmatpush1.msra.mxu0 0.0
    %587 = vmatprep.subr.mxu0 0.0
    %588 = vmatpush1.msra.mxu0 0.0
    %589 = vmatprep.subr.mxu0 0.0
    %590 = vmatpush1.msra.mxu0 0.0
    %591 = vmatprep.subr.mxu0 0.0
    %592 = vmatpush1.msra.mxu0 0.0
    %593 = vmatprep.subr.mxu0 0.0
    %594 = vmatpush1.msra.mxu0 0.0
    %595 = vmatprep.subr.mxu0 0.0
    %596 = vmatpush1.msra.mxu0 0.0
    %597 = vmatprep.subr.mxu0 0.0
    %598 = vmatpush1.msra.mxu0 0.0
    %599 = vmatprep.subr.mxu0 0.0
    %600 = vmatpush1.msra.mxu0 0.0
    %601 = vmatprep.subr.mxu0 0.0
    %602 = vmatpush1.msra.mxu0 0.0
    %603 = vmatprep.subr.mxu0 0.0
    %604 = vmatpush1.msra.mxu0 0.0
    %605 = vmatprep.subr.mxu0 0.0
    %606 = vmatpush1.msra.mxu0 0.0
    %607 = vmatprep.subr.mxu0 0.0
    %608 = vmatpush1.msra.mxu0 0.0
    %609 = vmatprep.subr.mxu0 0.0
    %610 = vmatpush1.msra.mxu0 0.0
    %611 = vmatprep.subr.mxu0 0.0
    %612 = vmatpush1.msra.mxu0 0.0
    %613 = vmatprep.subr.mxu0 0.0
    %614 = vmatpush1.msra.mxu0 0.0
    %615 = vmatprep.subr.mxu0 0.0
    %616 = vmatpush1.msra.mxu0 0.0
    %617 = vmatprep.subr.mxu0 0.0
    %618 = vmatpush1.msra.mxu0 0.0
    %619 = vmatprep.subr.mxu0 0.0
    %620 = vmatpush1.msra.mxu0 0.0
    %621 = vmatprep.subr.mxu0 0.0
    %622 = vmatpush1.msra.mxu0 0.0
    %623 = vmatprep.subr.mxu0 0.0
    %624 = vmatpush1.msra.mxu0 0.0
    %625 = vmatprep.subr.mxu0 0.0
    %626 = vmatpush1.msra.mxu0 0.0
    %627 = vmatprep.subr.mxu0 0.0
    %628 = vmatpush1.msra.mxu0 0.0
    %629 = vmatprep.subr.mxu0 0.0
    %630 = vmatpush1.msra.mxu0 0.0
    %631 = vmatprep.mubr.f32.mxu0 0.0
    %632 = vmatmul.mubr.f32.gmra.mrb[0].mxu0 %v565
    %v633 = vpop.f32.mrb[0].mxu0
    %v634 = vadd.f32 0.0, %v633
    %v635 = vpop.f32.mrb[0].mxu0
    %636 = vdwg.mxu0
    %v637 = vadd.f32 %v561, %v634
    %v638 = vxor.u32 %v637, 2147483648
    %v639 = vmul.f32 %v638, 1.442695
    %v640 = vpow.pop %v639
    %v641 = vadd.f32 %v640, 1.0
    %v642 = vrcp.pop %v641
    %v643 = vmul.f32 1.0, %v642
    %v644 = vtanh.pop %v637
    %v645 = vmul.f32 %v643, %v552
    %647 = vrot.lane.b32.xlu0 %v644, 64
    %v648 = vpop.permute.xlu0 %647
    %v650 = vmul.f32 %v643, %v648
    %652 = vrot.lane.b32.xlu0 %v650, 32
    %v653 = vpop.permute.xlu0 %652
    %v655 = vadd.f32 %v645, %v653
    %v656 = vtanh.pop %v655
    %658 = vrot.lane.b32.xlu0 %v656, 64
    %v659 = vpop.permute.xlu0 %658
    %v661 = vmul.f32 %v643, %v659
    %s662 = scalar_lea.vmem [#allocation2], 24
    %v663 = vld [vmem:[%s662] sm:$0xff]
    %v664 = vadd.f32 %v663, %v29
    %666 = vrot.lane.b32.xlu0 %v661, 32
    %v667 = vpop.permute.xlu0 %666
    %v668 = vsel %vm214, %v667, 0
    %670 = vmatprep.subr.mxu0 0.0
    %671 = vmatpush1.msra.mxu0 %v354
    %672 = vmatprep.subr.mxu0 0.0
    %673 = vmatpush1.msra.mxu0 %v355
    %674 = vmatprep.subr.mxu0 0.0
    %675 = vmatpush1.msra.mxu0 %v356
    %676 = vmatprep.subr.mxu0 0.0
    %677 = vmatpush1.msra.mxu0 %v357
    %678 = vmatprep.subr.mxu0 0.0
    %679 = vmatpush1.msra.mxu0 0.0
    %680 = vmatprep.subr.mxu0 0.0
    %681 = vmatpush1.msra.mxu0 0.0
    %682 = vmatprep.subr.mxu0 0.0
    %683 = vmatpush1.msra.mxu0 0.0
    %684 = vmatprep.subr.mxu0 0.0
    %685 = vmatpush1.msra.mxu0 0.0
    %686 = vmatprep.subr.mxu0 0.0
    %687 = vmatpush1.msra.mxu0 0.0
    %688 = vmatprep.subr.mxu0 0.0
    %689 = vmatpush1.msra.mxu0 0.0
    %690 = vmatprep.subr.mxu0 0.0
    %691 = vmatpush1.msra.mxu0 0.0
    %692 = vmatprep.subr.mxu0 0.0
    %693 = vmatpush1.msra.mxu0 0.0
    %694 = vmatprep.subr.mxu0 0.0
    %695 = vmatpush1.msra.mxu0 0.0
    %696 = vmatprep.subr.mxu0 0.0
    %697 = vmatpush1.msra.mxu0 0.0
    %698 = vmatprep.subr.mxu0 0.0
    %699 = vmatpush1.msra.mxu0 0.0
    %700 = vmatprep.subr.mxu0 0.0
    %701 = vmatpush1.msra.mxu0 0.0
    %702 = vmatprep.subr.mxu0 0.0
    %703 = vmatpush1.msra.mxu0 0.0
    %704 = vmatprep.subr.mxu0 0.0
    %705 = vmatpush1.msra.mxu0 0.0
    %706 = vmatprep.subr.mxu0 0.0
    %707 = vmatpush1.msra.mxu0 0.0
    %708 = vmatprep.subr.mxu0 0.0
    %709 = vmatpush1.msra.mxu0 0.0
    %710 = vmatprep.subr.mxu0 0.0
    %711 = vmatpush1.msra.mxu0 0.0
    %712 = vmatprep.subr.mxu0 0.0
    %713 = vmatpush1.msra.mxu0 0.0
    %714 = vmatprep.subr.mxu0 0.0
    %715 = vmatpush1.msra.mxu0 0.0
    %716 = vmatprep.subr.mxu0 0.0
    %717 = vmatpush1.msra.mxu0 0.0
    %718 = vmatprep.subr.mxu0 0.0
    %719 = vmatpush1.msra.mxu0 0.0
    %720 = vmatprep.subr.mxu0 0.0
    %721 = vmatpush1.msra.mxu0 0.0
    %722 = vmatprep.subr.mxu0 0.0
    %723 = vmatpush1.msra.mxu0 0.0
    %724 = vmatprep.subr.mxu0 0.0
    %725 = vmatpush1.msra.mxu0 0.0
    %726 = vmatprep.subr.mxu0 0.0
    %727 = vmatpush1.msra.mxu0 0.0
    %728 = vmatprep.subr.mxu0 0.0
    %729 = vmatpush1.msra.mxu0 0.0
    %730 = vmatprep.subr.mxu0 0.0
    %731 = vmatpush1.msra.mxu0 0.0
    %732 = vmatprep.subr.mxu0 0.0
    %733 = vmatpush1.msra.mxu0 0.0
    %734 = vmatprep.mubr.f32.mxu0 0.0
    %735 = vmatmul.mubr.f32.gmra.mrb[0].mxu0 %v668
    %v736 = vpop.f32.mrb[0].mxu0
    %v737 = vadd.f32 0.0, %v736
    %v738 = vpop.f32.mrb[0].mxu0
    %739 = vdwg.mxu0
    %v740 = vadd.f32 %v664, %v737
    %v741 = vxor.u32 %v740, 2147483648
    %v742 = vmul.f32 %v741, 1.442695
    %v743 = vpow.pop %v742
    %v744 = vadd.f32 %v743, 1.0
    %v745 = vrcp.pop %v744
    %v746 = vmul.f32 1.0, %v745
    %v747 = vtanh.pop %v740
    %v748 = vmul.f32 %v746, %v655
    %750 = vrot.lane.b32.xlu0 %v747, 64
    %v751 = vpop.permute.xlu0 %750
    %v753 = vmul.f32 %v746, %v751
    %755 = vrot.lane.b32.xlu0 %v753, 32
    %v756 = vpop.permute.xlu0 %755
    %v758 = vadd.f32 %v748, %v756
    %v759 = vtanh.pop %v758
    %761 = vrot.lane.b32.xlu0 %v759, 64
    %v762 = vpop.permute.xlu0 %761
    %v764 = vmul.f32 %v746, %v762
    %s765 = scalar_lea.vmem [#allocation2], 32
    %v766 = vld [vmem:[%s765] sm:$0xff]
    %v767 = vadd.f32 %v766, %v29
    %769 = vrot.lane.b32.xlu0 %v764, 32
    %v770 = vpop.permute.xlu0 %769
    %v771 = vsel %vm214, %v770, 0
    %773 = vmatprep.subr.mxu0 0.0
    %774 = vmatpush1.msra.mxu0 %v354
    %775 = vmatprep.subr.mxu0 0.0
    %776 = vmatpush1.msra.mxu0 %v355
    %777 = vmatprep.subr.mxu0 0.0
    %778 = vmatpush1.msra.mxu0 %v356
    %779 = vmatprep.subr.mxu0 0.0
    %780 = vmatpush1.msra.mxu0 %v357
    %781 = vmatprep.subr.mxu0 0.0
    %782 = vmatpush1.msra.mxu0 0.0
    %783 = vmatprep.subr.mxu0 0.0
    %784 = vmatpush1.msra.mxu0 0.0
    %785 = vmatprep.subr.mxu0 0.0
    %786 = vmatpush1.msra.mxu0 0.0
    %787 = vmatprep.subr.mxu0 0.0
    %788 = vmatpush1.msra.mxu0 0.0
    %789 = vmatprep.subr.mxu0 0.0
    %790 = vmatpush1.msra.mxu0 0.0
    %791 = vmatprep.subr.mxu0 0.0
    %792 = vmatpush1.msra.mxu0 0.0
    %793 = vmatprep.subr.mxu0 0.0
    %794 = vmatpush1.msra.mxu0 0.0
    %795 = vmatprep.subr.mxu0 0.0
    %796 = vmatpush1.msra.mxu0 0.0
    %797 = vmatprep.subr.mxu0 0.0
    %798 = vmatpush1.msra.mxu0 0.0
    %799 = vmatprep.subr.mxu0 0.0
    %800 = vmatpush1.msra.mxu0 0.0
    %801 = vmatprep.subr.mxu0 0.0
    %802 = vmatpush1.msra.mxu0 0.0
    %803 = vmatprep.subr.mxu0 0.0
    %804 = vmatpush1.msra.mxu0 0.0
    %805 = vmatprep.subr.mxu0 0.0
    %806 = vmatpush1.msra.mxu0 0.0
    %807 = vmatprep.subr.mxu0 0.0
    %808 = vmatpush1.msra.mxu0 0.0
    %809 = vmatprep.subr.mxu0 0.0
    %810 = vmatpush1.msra.mxu0 0.0
    %811 = vmatprep.subr.mxu0 0.0
    %812 = vmatpush1.msra.mxu0 0.0
    %813 = vmatprep.subr.mxu0 0.0
    %814 = vmatpush1.msra.mxu0 0.0
    %815 = vmatprep.subr.mxu0 0.0
    %816 = vmatpush1.msra.mxu0 0.0
    %817 = vmatprep.subr.mxu0 0.0
    %818 = vmatpush1.msra.mxu0 0.0
    %819 = vmatprep.subr.mxu0 0.0
    %820 = vmatpush1.msra.mxu0 0.0
    %821 = vmatprep.subr.mxu0 0.0
    %822 = vmatpush1.msra.mxu0 0.0
    %823 = vmatprep.subr.mxu0 0.0
    %824 = vmatpush1.msra.mxu0 0.0
    %825 = vmatprep.subr.mxu0 0.0
    %826 = vmatpush1.msra.mxu0 0.0
    %827 = vmatprep.subr.mxu0 0.0
    %828 = vmatpush1.msra.mxu0 0.0
    %829 = vmatprep.subr.mxu0 0.0
    %830 = vmatpush1.msra.mxu0 0.0
    %831 = vmatprep.subr.mxu0 0.0
    %832 = vmatpush1.msra.mxu0 0.0
    %833 = vmatprep.subr.mxu0 0.0
    %834 = vmatpush1.msra.mxu0 0.0
    %835 = vmatprep.subr.mxu0 0.0
    %836 = vmatpush1.msra.mxu0 0.0
    %837 = vmatprep.mubr.f32.mxu0 0.0
    %838 = vmatmul.mubr.f32.gmra.mrb[0].mxu0 %v771
    %v839 = vpop.f32.mrb[0].mxu0
    %v840 = vadd.f32 0.0, %v839
    %v841 = vpop.f32.mrb[0].mxu0
    %842 = vdwg.mxu0
    %v843 = vadd.f32 %v767, %v840
    %v844 = vxor.u32 %v843, 2147483648
    %v845 = vmul.f32 %v844, 1.442695
    %v846 = vpow.pop %v845
    %v847 = vadd.f32 %v846, 1.0
    %v848 = vrcp.pop %v847
    %v849 = vmul.f32 1.0, %v848
    %v850 = vtanh.pop %v843
    %v851 = vmul.f32 %v849, %v758
    %853 = vrot.lane.b32.xlu0 %v850, 64
    %v854 = vpop.permute.xlu0 %853
    %v856 = vmul.f32 %v849, %v854
    %858 = vrot.lane.b32.xlu0 %v856, 32
    %v859 = vpop.permute.xlu0 %858
    %v861 = vadd.f32 %v851, %v859
    %v862 = vtanh.pop %v861
    %864 = vrot.lane.b32.xlu0 %v862, 64
    %v865 = vpop.permute.xlu0 %864
    %v867 = vmul.f32 %v849, %v865
    %s868 = scalar_lea.vmem [#allocation2], 40
    %v869 = vld [vmem:[%s868] sm:$0xff]
    %v870 = vadd.f32 %v869, %v29
    %872 = vrot.lane.b32.xlu0 %v867, 32
    %v873 = vpop.permute.xlu0 %872
    %v874 = vsel %vm214, %v873, 0
    %876 = vmatprep.subr.mxu0 0.0
    %877 = vmatpush1.msra.mxu0 %v354
    %878 = vmatprep.subr.mxu0 0.0
    %879 = vmatpush1.msra.mxu0 %v355
    %880 = vmatprep.subr.mxu0 0.0
    %881 = vmatpush1.msra.mxu0 %v356
    %882 = vmatprep.subr.mxu0 0.0
    %883 = vmatpush1.msra.mxu0 %v357
    %884 = vmatprep.subr.mxu0 0.0
    %885 = vmatpush1.msra.mxu0 0.0
    %886 = vmatprep.subr.mxu0 0.0
    %887 = vmatpush1.msra.mxu0 0.0
    %888 = vmatprep.subr.mxu0 0.0
    %889 = vmatpush1.msra.mxu0 0.0
    %890 = vmatprep.subr.mxu0 0.0
    %891 = vmatpush1.msra.mxu0 0.0
    %892 = vmatprep.subr.mxu0 0.0
    %893 = vmatpush1.msra.mxu0 0.0
    %894 = vmatprep.subr.mxu0 0.0
    %895 = vmatpush1.msra.mxu0 0.0
    %896 = vmatprep.subr.mxu0 0.0
    %897 = vmatpush1.msra.mxu0 0.0
    %898 = vmatprep.subr.mxu0 0.0
    %899 = vmatpush1.msra.mxu0 0.0
    %900 = vmatprep.subr.mxu0 0.0
    %901 = vmatpush1.msra.mxu0 0.0
    %902 = vmatprep.subr.mxu0 0.0
    %903 = vmatpush1.msra.mxu0 0.0
    %904 = vmatprep.subr.mxu0 0.0
    %905 = vmatpush1.msra.mxu0 0.0
    %906 = vmatprep.subr.mxu0 0.0
    %907 = vmatpush1.msra.mxu0 0.0
    %908 = vmatprep.subr.mxu0 0.0
    %909 = vmatpush1.msra.mxu0 0.0
    %910 = vmatprep.subr.mxu0 0.0
    %911 = vmatpush1.msra.mxu0 0.0
    %912 = vmatprep.subr.mxu0 0.0
    %913 = vmatpush1.msra.mxu0 0.0
    %914 = vmatprep.subr.mxu0 0.0
    %915 = vmatpush1.msra.mxu0 0.0
    %916 = vmatprep.subr.mxu0 0.0
    %917 = vmatpush1.msra.mxu0 0.0
    %918 = vmatprep.subr.mxu0 0.0
    %919 = vmatpush1.msra.mxu0 0.0
    %920 = vmatprep.subr.mxu0 0.0
    %921 = vmatpush1.msra.mxu0 0.0
    %922 = vmatprep.subr.mxu0 0.0
    %923 = vmatpush1.msra.mxu0 0.0
    %924 = vmatprep.subr.mxu0 0.0
    %925 = vmatpush1.msra.mxu0 0.0
    %926 = vmatprep.subr.mxu0 0.0
    %927 = vmatpush1.msra.mxu0 0.0
    %928 = vmatprep.subr.mxu0 0.0
    %929 = vmatpush1.msra.mxu0 0.0
    %930 = vmatprep.subr.mxu0 0.0
    %931 = vmatpush1.msra.mxu0 0.0
    %932 = vmatprep.subr.mxu0 0.0
    %933 = vmatpush1.msra.mxu0 0.0
    %934 = vmatprep.subr.mxu0 0.0
    %935 = vmatpush1.msra.mxu0 0.0
    %936 = vmatprep.subr.mxu0 0.0
    %937 = vmatpush1.msra.mxu0 0.0
    %938 = vmatprep.subr.mxu0 0.0
    %939 = vmatpush1.msra.mxu0 0.0
    %940 = vmatprep.mubr.f32.mxu0 0.0
    %941 = vmatmul.mubr.f32.gmra.mrb[0].mxu0 %v874
    %v942 = vpop.f32.mrb[0].mxu0
    %v943 = vadd.f32 0.0, %v942
    %v944 = vpop.f32.mrb[0].mxu0
    %945 = vdwg.mxu0
    %v946 = vadd.f32 %v870, %v943
    %v947 = vxor.u32 %v946, 2147483648
    %v948 = vmul.f32 %v947, 1.442695
    %v949 = vpow.pop %v948
    %v950 = vadd.f32 %v949, 1.0
    %v951 = vrcp.pop %v950
    %v952 = vmul.f32 1.0, %v951
    %v953 = vtanh.pop %v946
    %v954 = vmul.f32 %v952, %v861
    %956 = vrot.lane.b32.xlu0 %v953, 64
    %v957 = vpop.permute.xlu0 %956
    %v959 = vmul.f32 %v952, %v957
    %961 = vrot.lane.b32.xlu0 %v959, 32
    %v962 = vpop.permute.xlu0 %961
    %v964 = vadd.f32 %v954, %v962
    %v965 = vtanh.pop %v964
    %967 = vrot.lane.b32.xlu0 %v965, 64
    %v968 = vpop.permute.xlu0 %967
    %v970 = vmul.f32 %v952, %v968
    %s971 = scalar_lea.vmem [#allocation2], 48
    %v972 = vld [vmem:[%s971] sm:$0xff]
    %v973 = vadd.f32 %v972, %v29
    %975 = vrot.lane.b32.xlu0 %v970, 32
    %v976 = vpop.permute.xlu0 %975
    %v977 = vsel %vm214, %v976, 0
    %979 = vmatprep.subr.mxu0 0.0
    %980 = vmatpush1.msra.mxu0 %v354
    %981 = vmatprep.subr.mxu0 0.0
    %982 = vmatpush1.msra.mxu0 %v355
    %983 = vmatprep.subr.mxu0 0.0
    %984 = vmatpush1.msra.mxu0 %v356
    %985 = vmatprep.subr.mxu0 0.0
    %986 = vmatpush1.msra.mxu0 %v357
    %987 = vmatprep.subr.mxu0 0.0
    %988 = vmatpush1.msra.mxu0 0.0
    %989 = vmatprep.subr.mxu0 0.0
    %990 = vmatpush1.msra.mxu0 0.0
    %991 = vmatprep.subr.mxu0 0.0
    %992 = vmatpush1.msra.mxu0 0.0
    %993 = vmatprep.subr.mxu0 0.0
    %994 = vmatpush1.msra.mxu0 0.0
    %995 = vmatprep.subr.mxu0 0.0
    %996 = vmatpush1.msra.mxu0 0.0
    %997 = vmatprep.subr.mxu0 0.0
    %998 = vmatpush1.msra.mxu0 0.0
    %999 = vmatprep.subr.mxu0 0.0
    %1000 = vmatpush1.msra.mxu0 0.0
    %1001 = vmatprep.subr.mxu0 0.0
    %1002 = vmatpush1.msra.mxu0 0.0
    %1003 = vmatprep.subr.mxu0 0.0
    %1004 = vmatpush1.msra.mxu0 0.0
    %1005 = vmatprep.subr.mxu0 0.0
    %1006 = vmatpush1.msra.mxu0 0.0
    %1007 = vmatprep.subr.mxu0 0.0
    %1008 = vmatpush1.msra.mxu0 0.0
    %1009 = vmatprep.subr.mxu0 0.0
    %1010 = vmatpush1.msra.mxu0 0.0
    %1011 = vmatprep.subr.mxu0 0.0
    %1012 = vmatpush1.msra.mxu0 0.0
    %1013 = vmatprep.subr.mxu0 0.0
    %1014 = vmatpush1.msra.mxu0 0.0
    %1015 = vmatprep.subr.mxu0 0.0
    %1016 = vmatpush1.msra.mxu0 0.0
    %1017 = vmatprep.subr.mxu0 0.0
    %1018 = vmatpush1.msra.mxu0 0.0
    %1019 = vmatprep.subr.mxu0 0.0
    %1020 = vmatpush1.msra.mxu0 0.0
    %1021 = vmatprep.subr.mxu0 0.0
    %1022 = vmatpush1.msra.mxu0 0.0
    %1023 = vmatprep.subr.mxu0 0.0
    %1024 = vmatpush1.msra.mxu0 0.0
    %1025 = vmatprep.subr.mxu0 0.0
    %1026 = vmatpush1.msra.mxu0 0.0
    %1027 = vmatprep.subr.mxu0 0.0
    %1028 = vmatpush1.msra.mxu0 0.0
    %1029 = vmatprep.subr.mxu0 0.0
    %1030 = vmatpush1.msra.mxu0 0.0
    %1031 = vmatprep.subr.mxu0 0.0
    %1032 = vmatpush1.msra.mxu0 0.0
    %1033 = vmatprep.subr.mxu0 0.0
    %1034 = vmatpush1.msra.mxu0 0.0
    %1035 = vmatprep.subr.mxu0 0.0
    %1036 = vmatpush1.msra.mxu0 0.0
    %1037 = vmatprep.subr.mxu0 0.0
    %1038 = vmatpush1.msra.mxu0 0.0
    %1039 = vmatprep.subr.mxu0 0.0
    %1040 = vmatpush1.msra.mxu0 0.0
    %1041 = vmatprep.subr.mxu0 0.0
    %1042 = vmatpush1.msra.mxu0 0.0
    %1043 = vmatprep.mubr.f32.mxu0 0.0
    %1044 = vmatmul.mubr.f32.gmra.mrb[0].mxu0 %v977
    %v1045 = vpop.f32.mrb[0].mxu0
    %v1046 = vadd.f32 0.0, %v1045
    %v1047 = vpop.f32.mrb[0].mxu0
    %1048 = vdwg.mxu0
    %v1049 = vadd.f32 %v973, %v1046
    %v1050 = vxor.u32 %v1049, 2147483648
    %v1051 = vmul.f32 %v1050, 1.442695
    %v1052 = vpow.pop %v1051
    %v1053 = vadd.f32 %v1052, 1.0
    %v1054 = vrcp.pop %v1053
    %v1055 = vmul.f32 1.0, %v1054
    %v1056 = vtanh.pop %v1049
    %v1057 = vmul.f32 %v1055, %v964
    %1059 = vrot.lane.b32.xlu0 %v1056, 64
    %v1060 = vpop.permute.xlu0 %1059
    %v1062 = vmul.f32 %v1055, %v1060
    %1064 = vrot.lane.b32.xlu0 %v1062, 32
    %v1065 = vpop.permute.xlu0 %1064
    %v1067 = vadd.f32 %v1057, %v1065
    %v1068 = vtanh.pop %v1067
    %1070 = vrot.lane.b32.xlu0 %v1068, 64
    %v1071 = vpop.permute.xlu0 %1070
    %v1073 = vmul.f32 %v1055, %v1071
    %s1074 = scalar_lea.vmem [#allocation2], 56
    %v1075 = vld [vmem:[%s1074] sm:$0xff]
    %v1076 = vadd.f32 %v1075, %v29
    %1078 = vrot.lane.b32.xlu0 %v1073, 32
    %v1079 = vpop.permute.xlu0 %1078
    %v1080 = vsel %vm214, %v1079, 0
    %1082 = vmatprep.subr.mxu0 0.0
    %1083 = vmatpush1.msra.mxu0 %v354
    %1084 = vmatprep.subr.mxu0 0.0
    %1085 = vmatpush1.msra.mxu0 %v355
    %1086 = vmatprep.subr.mxu0 0.0
    %1087 = vmatpush1.msra.mxu0 %v356
    %1088 = vmatprep.subr.mxu0 0.0
    %1089 = vmatpush1.msra.mxu0 %v357
    %1090 = vmatprep.subr.mxu0 0.0
    %1091 = vmatpush1.msra.mxu0 0.0
    %1092 = vmatprep.subr.mxu0 0.0
    %1093 = vmatpush1.msra.mxu0 0.0
    %1094 = vmatprep.subr.mxu0 0.0
    %1095 = vmatpush1.msra.mxu0 0.0
    %1096 = vmatprep.subr.mxu0 0.0
    %1097 = vmatpush1.msra.mxu0 0.0
    %1098 = vmatprep.subr.mxu0 0.0
    %1099 = vmatpush1.msra.mxu0 0.0
    %1100 = vmatprep.subr.mxu0 0.0
    %1101 = vmatpush1.msra.mxu0 0.0
    %1102 = vmatprep.subr.mxu0 0.0
    %1103 = vmatpush1.msra.mxu0 0.0
    %1104 = vmatprep.subr.mxu0 0.0
    %1105 = vmatpush1.msra.mxu0 0.0
    %1106 = vmatprep.subr.mxu0 0.0
    %1107 = vmatpush1.msra.mxu0 0.0
    %1108 = vmatprep.subr.mxu0 0.0
    %1109 = vmatpush1.msra.mxu0 0.0
    %1110 = vmatprep.subr.mxu0 0.0
    %1111 = vmatpush1.msra.mxu0 0.0
    %1112 = vmatprep.subr.mxu0 0.0
    %1113 = vmatpush1.msra.mxu0 0.0
    %1114 = vmatprep.subr.mxu0 0.0
    %1115 = vmatpush1.msra.mxu0 0.0
    %1116 = vmatprep.subr.mxu0 0.0
    %1117 = vmatpush1.msra.mxu0 0.0
    %1118 = vmatprep.subr.mxu0 0.0
    %1119 = vmatpush1.msra.mxu0 0.0
    %1120 = vmatprep.subr.mxu0 0.0
    %1121 = vmatpush1.msra.mxu0 0.0
    %1122 = vmatprep.subr.mxu0 0.0
    %1123 = vmatpush1.msra.mxu0 0.0
    %1124 = vmatprep.subr.mxu0 0.0
    %1125 = vmatpush1.msra.mxu0 0.0
    %1126 = vmatprep.subr.mxu0 0.0
    %1127 = vmatpush1.msra.mxu0 0.0
    %1128 = vmatprep.subr.mxu0 0.0
    %1129 = vmatpush1.msra.mxu0 0.0
    %1130 = vmatprep.subr.mxu0 0.0
    %1131 = vmatpush1.msra.mxu0 0.0
    %1132 = vmatprep.subr.mxu0 0.0
    %1133 = vmatpush1.msra.mxu0 0.0
    %1134 = vmatprep.subr.mxu0 0.0
    %1135 = vmatpush1.msra.mxu0 0.0
    %1136 = vmatprep.subr.mxu0 0.0
    %1137 = vmatpush1.msra.mxu0 0.0
    %1138 = vmatprep.subr.mxu0 0.0
    %1139 = vmatpush1.msra.mxu0 0.0
    %1140 = vmatprep.subr.mxu0 0.0
    %1141 = vmatpush1.msra.mxu0 0.0
    %1142 = vmatprep.subr.mxu0 0.0
    %1143 = vmatpush1.msra.mxu0 0.0
    %1144 = vmatprep.subr.mxu0 0.0
    %1145 = vmatpush1.msra.mxu0 0.0
    %1146 = vmatprep.mubr.f32.mxu0 0.0
    %1147 = vmatmul.mubr.f32.gmra.mrb[0].mxu0 %v1080
    %v1148 = vpop.f32.mrb[0].mxu0
    %v1149 = vadd.f32 0.0, %v1148
    %v1150 = vpop.f32.mrb[0].mxu0
    %1151 = vdwg.mxu0
    %v1152 = vadd.f32 %v1076, %v1149
    %v1153 = vxor.u32 %v1152, 2147483648
    %v1154 = vmul.f32 %v1153, 1.442695
    %v1155 = vpow.pop %v1154
    %v1156 = vadd.f32 %v1155, 1.0
    %v1157 = vrcp.pop %v1156
    %v1158 = vmul.f32 1.0, %v1157
    %v1159 = vtanh.pop %v1152
    %v1160 = vmul.f32 %v1158, %v1067
    %1162 = vrot.lane.b32.xlu0 %v1159, 64
    %v1163 = vpop.permute.xlu0 %1162
    %v1165 = vmul.f32 %v1158, %v1163
    %1167 = vrot.lane.b32.xlu0 %v1165, 32
    %v1168 = vpop.permute.xlu0 %1167
    %v1170 = vadd.f32 %v1160, %v1168
    %v1171 = vtanh.pop %v1170
    %1173 = vrot.lane.b32.xlu0 %v1171, 64
    %v1174 = vpop.permute.xlu0 %1173
    %v1176 = vmul.f32 %v1158, %v1174
    %v1177 = vld [vmem:[%s5] sm:$0xff]
    %v1178 = vld [vmem:[%s5 + $0x8] sm:$0xff]
    %v1179 = vld [vmem:[%s5 + $0x10] sm:$0xff]
    %v1180 = vld [vmem:[%s5 + $0x18] sm:$0xff]
    %1182 = vrot.lane.b32.xlu0 %v1176, 32
    %v1183 = vpop.permute.xlu0 %1182
    %v1184 = vsel %vm214, %v1183, 0
    %1186 = vmatprep.subr.mxu0 0.0
    %1187 = vmatpush1.msra.mxu0 %v1177
    %1188 = vmatprep.subr.mxu0 0.0
    %1189 = vmatpush1.msra.mxu0 %v1178
    %1190 = vmatprep.subr.mxu0 0.0
    %1191 = vmatpush1.msra.mxu0 %v1179
    %1192 = vmatprep.subr.mxu0 0.0
    %1193 = vmatpush1.msra.mxu0 %v1180
    %1194 = vmatprep.subr.mxu0 0.0
    %1195 = vmatpush1.msra.mxu0 0.0
    %1196 = vmatprep.subr.mxu0 0.0
    %1197 = vmatpush1.msra.mxu0 0.0
    %1198 = vmatprep.subr.mxu0 0.0
    %1199 = vmatpush1.msra.mxu0 0.0
    %1200 = vmatprep.subr.mxu0 0.0
    %1201 = vmatpush1.msra.mxu0 0.0
    %1202 = vmatprep.subr.mxu0 0.0
    %1203 = vmatpush1.msra.mxu0 0.0
    %1204 = vmatprep.subr.mxu0 0.0
    %1205 = vmatpush1.msra.mxu0 0.0
    %1206 = vmatprep.subr.mxu0 0.0
    %1207 = vmatpush1.msra.mxu0 0.0
    %1208 = vmatprep.subr.mxu0 0.0
    %1209 = vmatpush1.msra.mxu0 0.0
    %1210 = vmatprep.subr.mxu0 0.0
    %1211 = vmatpush1.msra.mxu0 0.0
    %1212 = vmatprep.subr.mxu0 0.0
    %1213 = vmatpush1.msra.mxu0 0.0
    %1214 = vmatprep.subr.mxu0 0.0
    %1215 = vmatpush1.msra.mxu0 0.0
    %1216 = vmatprep.subr.mxu0 0.0
    %1217 = vmatpush1.msra.mxu0 0.0
    %1218 = vmatprep.subr.mxu0 0.0
    %1219 = vmatpush1.msra.mxu0 0.0
    %1220 = vmatprep.subr.mxu0 0.0
    %1221 = vmatpush1.msra.mxu0 0.0
    %1222 = vmatprep.subr.mxu0 0.0
    %1223 = vmatpush1.msra.mxu0 0.0
    %1224 = vmatprep.subr.mxu0 0.0
    %1225 = vmatpush1.msra.mxu0 0.0
    %1226 = vmatprep.subr.mxu0 0.0
    %1227 = vmatpush1.msra.mxu0 0.0
    %1228 = vmatprep.subr.mxu0 0.0
    %1229 = vmatpush1.msra.mxu0 0.0
    %1230 = vmatprep.subr.mxu0 0.0
    %1231 = vmatpush1.msra.mxu0 0.0
    %1232 = vmatprep.subr.mxu0 0.0
    %1233 = vmatpush1.msra.mxu0 0.0
    %1234 = vmatprep.subr.mxu0 0.0
    %1235 = vmatpush1.msra.mxu0 0.0
    %1236 = vmatprep.subr.mxu0 0.0
    %1237 = vmatpush1.msra.mxu0 0.0
    %1238 = vmatprep.subr.mxu0 0.0
    %1239 = vmatpush1.msra.mxu0 0.0
    %1240 = vmatprep.subr.mxu0 0.0
    %1241 = vmatpush1.msra.mxu0 0.0
    %1242 = vmatprep.subr.mxu0 0.0
    %1243 = vmatpush1.msra.mxu0 0.0
    %1244 = vmatprep.subr.mxu0 0.0
    %1245 = vmatpush1.msra.mxu0 0.0
    %1246 = vmatprep.subr.mxu0 0.0
    %1247 = vmatpush1.msra.mxu0 0.0
    %1248 = vmatprep.subr.mxu0 0.0
    %1249 = vmatpush1.msra.mxu0 0.0
    %1250 = vmatprep.mubr.f32.mxu0 0.0
    %1251 = vmatmul.mubr.f32.gmra.mrb[0].mxu0 %v1184
    %v1252 = vpop.f32.mrb[0].mxu0
    %v1253 = vadd.f32 0.0, %v1252
    %v1254 = vpop.f32.mrb[0].mxu0
    %1255 = vdwg.mxu0
    %1256 = vst [vmem:[#allocation3] sm:$0xff] %v1253
    // Predicated region
    $region26: #{tpu_custom_call.1} parent=1 // pred_check
      _
    $region27: #{tpu_custom_call.1} parent=1 // pred_check_branch
      %1258 = sbr.rel (0) target = $region29
    $region28: #{tpu_custom_call.1} parent=1 // pred_region
      %s1260 = ssub.s32 128, 128
      %1261 = vsyncadd [#allocation4], %s1260
      %s1263 = sshll.u32 [#allocation3], 4
      %s1264 = int_to_ptr.vmem [resolvable:$true] %s1263
      %1266 = dma.vmem_to_hbm [thread:$0]  %s1264, 128, %s6, [#allocation4]
    $region29: #{tpu_custom_call.1} parent=1 // pred_fallthru
      _
    // Predicated region
    $region30: #{tpu_custom_call.1} parent=1 // pred_check
      _
    $region31: #{tpu_custom_call.1} parent=1 // pred_check_branch
      %1268 = sbr.rel (0) target = $region33
    $region32: #{tpu_custom_call.1} parent=1 // pred_region
      %1269 = dma.done [#allocation4], 128
    $region33: #{tpu_custom_call.1} parent=1 // pred_fallthru
      _
    %1270 = vsyncpa [#allocation4], 1

</llo_original>
